<compile_context>
chip_gen: v5e
topology: v5e:2x2
jax: 0.10.0
libtpu: 0.0.40
codegen_flags: <defaults>
</compile_context>

<pallas_src>
import functools
import math

import jax
import jax.numpy as jnp
from jax import lax
from jax.experimental import pallas as pl
from jax.experimental.pallas import tpu as pltpu

EPS = 1e-5
VMEM_LIMIT = 32 * 1024 * 1024
TILE_BUDGET = 6 * 1024 * 1024      # per-tile working-set budget used to pick TH


def _partial_stats(v):
    # (rows, C) f32 -> (2, C): per-channel [sum, sum-of-squares] in one pass.
    s = jnp.sum(v, axis=0, keepdims=True)
    ss = jnp.sum(v * v, axis=0, keepdims=True)
    return jnp.concatenate([s, ss], axis=0)


def _pick_tile_h(Hout, Wout, Cin, Cout, has_proj):
    """Largest TH dividing Hout (multiple of 8, or Hout itself) within budget."""
    def footprint(th):
        rows = th * Wout
        slab = rows * 9 * max(Cin, Cout) * 2                  # bf16 im2col slab
        outs = (2 if has_proj else 1) * 2 * rows * Cout * 4   # dbl-buffered z out
        acc = rows * Cout * 4                                  # f32 matmul result
        return slab + outs + acc
    cands = sorted({Hout} | {d for d in range(8, Hout + 1, 8) if Hout % d == 0},
                   reverse=True)
    for th in cands:
        if footprint(th) <= TILE_BUDGET:
            return th
    return cands[-1]


# ----------------------------- pass A kernel --------------------------------
def _conv1_kernel(xp_ref, w1_ref, *rest, stride, TH, Wout, Cin, Cout, has_proj):
    if has_proj:
        ws_ref, z1_ref, st1_ref, zs_ref, sts_ref = rest
    else:
        z1_ref, st1_ref = rest

    t = pl.program_id(1)
    r0 = t * TH
    if TH % 8 == 0:
        r0 = pl.multiple_of(r0, 8)
    rows = TH * Wout

    pieces = []
    if stride == 1:
        for kh in range(3):
            win = xp_ref[pl.ds(r0 + kh, TH), :, :]                    # (TH, W+2, Cin)
            for kw in range(3):
                pieces.append(win[:, kw:kw + Wout, :].reshape(rows, Cin))
    else:
        # stride 2: the wrapper re-grouped the padded input to (H+2, (W+2)//2, 2*Cin)
        # so the kw=0/1 taps are one contiguous lane-fused slice and kw=2 is a static
        # lane sub-slice; only the (cheap, major-dim) row access is strided.
        for kh in range(3):
            win = xp_ref[pl.ds(2 * r0 + kh, TH, stride=2), :, :]      # (TH, G, 2*Cin)
            pieces.append(win[:, 0:Wout, :].reshape(rows, 2 * Cin))           # kw = 0,1
            pieces.append(win[:, 1:Wout + 1, 0:Cin].reshape(rows, Cin))       # kw = 2

    slab = jnp.concatenate(pieces, axis=-1).astype(jnp.bfloat16)      # (rows, 9*Cin)
    z1 = jnp.dot(slab, w1_ref[...], preferred_element_type=jnp.float32)
    z1_ref[...] = z1.reshape(TH, Wout, Cout)
    st1_ref[...] = _partial_stats(z1)

    if has_proj:
        if stride == 1:
            xs = xp_ref[pl.ds(r0 + 1, TH), 1:1 + Wout, :]
        else:
            swin = xp_ref[pl.ds(2 * r0 + 1, TH, stride=2), :, :]
            xs = swin[:, 0:Wout, Cin:2 * Cin]
        zs = jnp.dot(xs.reshape(rows, Cin).astype(jnp.bfloat16), ws_ref[...],
                     preferred_element_type=jnp.float32)
        zs_ref[...] = zs.reshape(TH, Wout, Cout)
        sts_ref[...] = _partial_stats(zs)


# ----------------------------- pass B kernel --------------------------------
def _conv2_kernel(z1_ref, a1_ref, c1_ref, w2_ref, z2_ref, st2_ref,
                  *, TH, Hout, Wout, Cout, single_tile):
    t = pl.program_id(1)
    nt = pl.num_programs(1)
    r0 = t * TH
    if TH % 8 == 0:
        r0 = pl.multiple_of(r0, 8)
    rows = TH * Wout

    a1 = a1_ref[...]
    c1 = c1_ref[...]

    def bn_relu(v):
        return jnp.maximum(v * a1 + c1, 0.0)

    if single_tile:
        # whole image in one tile: halo rows are just the zero padding.
        mid = bn_relu(z1_ref[...])                                     # (TH, W, C)
        zrow = jnp.zeros((1, Wout, Cout), jnp.float32)
        hwin = jnp.concatenate([zrow, mid, zrow], axis=0)              # (TH+2, W, C)
    else:
        # row window [r0-1, r0+TH] with clamped boundary loads, zeroed after BN+ReLU.
        mid = bn_relu(z1_ref[pl.ds(r0, TH), :, :])                     # (TH, W, C)
        top = bn_relu(z1_ref[pl.ds(jnp.maximum(r0 - 1, 0), 1), :, :])  # (1, W, C)
        bot = bn_relu(z1_ref[pl.ds(jnp.minimum(r0 + TH, Hout - 1), 1), :, :])
        top = jnp.where(t > 0, top, 0.0)
        bot = jnp.where(t + 1 < nt, bot, 0.0)
        hwin = jnp.concatenate([top, mid, bot], axis=0)                # (TH+2, W, C)

    # +/-1 W shifts via zero-column concat (no padded scratch, no masked writes).
    zcol = jnp.zeros((TH + 2, 1, Cout), jnp.float32)
    left = jnp.concatenate([zcol, hwin[:, :Wout - 1, :]], axis=1)      # tap w-1 (kw=0)
    right = jnp.concatenate([hwin[:, 1:, :], zcol], axis=1)            # tap w+1 (kw=2)

    pieces = []
    for kh in range(3):
        for tap in (left, hwin, right):                                # kw = 0,1,2
            pieces.append(tap[kh:kh + TH].reshape(rows, Cout))
    slab = jnp.concatenate(pieces, axis=-1).astype(jnp.bfloat16)       # (rows, 9*Cout)

    z2 = jnp.dot(slab, w2_ref[...], preferred_element_type=jnp.float32)
    z2_ref[...] = z2.reshape(TH, Wout, Cout)
    st2_ref[...] = _partial_stats(z2)


# ----------------------------- pass C kernel --------------------------------
def _finalize_kernel(z2_ref, a2_ref, c2_ref, *rest, has_proj):
    if has_proj:
        zs_ref, as_ref, cs_ref, out_ref = rest
    else:
        xs_ref, out_ref = rest
    y = z2_ref[...] * a2_ref[...] + c2_ref[...]
    if has_proj:
        sc = zs_ref[...] * as_ref[...] + cs_ref[...]
    else:
        sc = xs_ref[...]
    out_ref[...] = jnp.maximum(y + sc, 0.0)


# ------------------------------- wrapper -------------------------------------
def _bn_affine(stats, gamma, beta, count):
    s = jnp.sum(stats, axis=(0, 1))                 # (2, C)
    mean = s[0] / count
    var = s[1] / count - mean * mean                # biased variance, one pass
    inv = lax.rsqrt(var + EPS)
    a = gamma * inv
    c = beta - mean * a
    return a.reshape(1, -1), c.reshape(1, -1)


def _cost(flops, ins, outs):
    nbytes = sum(int(math.prod(a.shape)) * jnp.dtype(a.dtype).itemsize
                 for a in list(ins) + list(outs))
    return pl.CostEstimate(flops=int(flops), transcendentals=0, bytes_accessed=nbytes)


def basic_block_forward(x_nchw, params, stride):
    """Fused BasicBlock forward.  Input/output are NCHW float32."""
    N, Cin, H, W = x_nchw.shape
    Cout = params["w1"].shape[0]
    Hout = (H - 1) // stride + 1
    Wout = (W - 1) // stride + 1
    has_proj = (stride != 1) or (Cin != Cout)
    if stride == 2 and W % 2 != 0:
        raise ValueError("stride-2 path requires even input width")

    TH = _pick_tile_h(Hout, Wout, Cin, Cout, has_proj)   # output rows per grid step
    T = Hout // TH
    grid = (N, T)
    cparams = pltpu.CompilerParams(
        dimension_semantics=("parallel", "parallel"),
        vmem_limit_bytes=VMEM_LIMIT)

    # glue: NCHW -> NHWC, 1-px zero pad for the 3x3 convs
    x_nhwc = jnp.transpose(x_nchw, (0, 2, 3, 1)).astype(jnp.float32)
    xp = jnp.pad(x_nhwc, ((0, 0), (1, 1), (1, 1), (0, 0)))
    if stride == 2:
        # free (row-major) re-grouping: fuse column pairs into the lane dim.
        xp_in = xp.reshape(N, H + 2, (W + 2) // 2, 2 * Cin)
    else:
        xp_in = xp

    # glue: weights OIHW -> (kh*kw*cin, cout), bf16 for the MXU
    w1m = jnp.transpose(params["w1"], (2, 3, 1, 0)).reshape(9 * Cin, Cout).astype(jnp.bfloat16)
    w2m = jnp.transpose(params["w2"], (2, 3, 1, 0)).reshape(9 * Cout, Cout).astype(jnp.bfloat16)

    # ===================== pass A: conv1 (+ proj conv) + stats ==============
    kernel_a = functools.partial(_conv1_kernel, stride=stride, TH=TH, Wout=Wout,
                                 Cin=Cin, Cout=Cout, has_proj=has_proj)
    in_specs_a = [
        pl.BlockSpec((None,) + xp_in.shape[1:], lambda n, t: (n, 0, 0, 0)),
        pl.BlockSpec(w1m.shape, lambda n, t: (0, 0)),
    ]
    inputs_a = [xp_in, w1m]
    out_shape_a = [
        jax.ShapeDtypeStruct((N, Hout, Wout, Cout), jnp.float32),     # z1
        jax.ShapeDtypeStruct((N, T, 2, Cout), jnp.float32),           # stats(z1)
    ]
    out_specs_a = [
        pl.BlockSpec((None, TH, Wout, Cout), lambda n, t: (n, t, 0, 0)),
        pl.BlockSpec((None, None, 2, Cout), lambda n, t: (n, t, 0, 0)),
    ]
    flops_a = 2 * N * Hout * Wout * 9 * Cin * Cout
    if has_proj:
        wsm = jnp.transpose(params["ws"][:, :, 0, 0], (1, 0)).astype(jnp.bfloat16)
        in_specs_a.append(pl.BlockSpec(wsm.shape, lambda n, t: (0, 0)))
        inputs_a.append(wsm)
        out_shape_a += [
            jax.ShapeDtypeStruct((N, Hout, Wout, Cout), jnp.float32),  # zs
            jax.ShapeDtypeStruct((N, T, 2, Cout), jnp.float32),        # stats(zs)
        ]
        out_specs_a += [
            pl.BlockSpec((None, TH, Wout, Cout), lambda n, t: (n, t, 0, 0)),
            pl.BlockSpec((None, None, 2, Cout), lambda n, t: (n, t, 0, 0)),
        ]
        flops_a += 2 * N * Hout * Wout * Cin * Cout

    outs_a = pl.pallas_call(
        kernel_a, grid=grid,
        in_specs=in_specs_a, out_specs=tuple(out_specs_a), out_shape=tuple(out_shape_a),
        compiler_params=cparams,
        cost_estimate=_cost(flops_a, inputs_a, out_shape_a),
    )(*inputs_a)
    if has_proj:
        z1, st1, zs, sts = outs_a
    else:
        z1, st1 = outs_a

    count = float(N * Hout * Wout)
    a1, c1 = _bn_affine(st1, params["g1"], params["b1"], count)

    # ===================== pass B: BN1 + ReLU + conv2 + stats ===============
    kernel_b = functools.partial(_conv2_kernel, TH=TH, Hout=Hout, Wout=Wout,
                                 Cout=Cout, single_tile=(T == 1))
    inputs_b = [z1, a1, c1, w2m]
    out_shape_b = [
        jax.ShapeDtypeStruct((N, Hout, Wout, Cout), jnp.float32),      # z2
        jax.ShapeDtypeStruct((N, T, 2, Cout), jnp.float32),            # stats(z2)
    ]
    z1_block = (None, TH, Wout, Cout) if T == 1 else (None, Hout, Wout, Cout)
    z2, st2 = pl.pallas_call(
        kernel_b, grid=grid,
        in_specs=[
            pl.BlockSpec(z1_block, lambda n, t: (n, 0, 0, 0)),
            pl.BlockSpec((1, Cout), lambda n, t: (0, 0)),
            pl.BlockSpec((1, Cout), lambda n, t: (0, 0)),
            pl.BlockSpec((9 * Cout, Cout), lambda n, t: (0, 0)),
        ],
        out_specs=(
            pl.BlockSpec((None, TH, Wout, Cout), lambda n, t: (n, t, 0, 0)),
            pl.BlockSpec((None, None, 2, Cout), lambda n, t: (n, t, 0, 0)),
        ),
        out_shape=tuple(out_shape_b),
        compiler_params=cparams,
        cost_estimate=_cost(2 * N * Hout * Wout * 9 * Cout * Cout, inputs_b, out_shape_b),
    )(*inputs_b)

    a2, c2 = _bn_affine(st2, params["g2"], params["b2"], count)

    # ============ pass C: BN2 + shortcut + add + ReLU (lane dense) ==========
    WC = Wout * Cout
    lane_tile = lambda v: jnp.tile(v, (1, Wout))            # (1,C) -> (1, W*C)
    kernel_c = functools.partial(_finalize_kernel, has_proj=has_proj)
    in_specs_c = [
        pl.BlockSpec((None, TH, WC), lambda n, t: (n, t, 0)),
        pl.BlockSpec((1, WC), lambda n, t: (0, 0)),
        pl.BlockSpec((1, WC), lambda n, t: (0, 0)),
    ]
    inputs_c = [z2.reshape(N, Hout, WC), lane_tile(a2), lane_tile(c2)]
    if has_proj:
        asc, csc = _bn_affine(sts, params["gs"], params["bs"], count)
        in_specs_c += [
            pl.BlockSpec((None, TH, WC), lambda n, t: (n, t, 0)),
            pl.BlockSpec((1, WC), lambda n, t: (0, 0)),
            pl.BlockSpec((1, WC), lambda n, t: (0, 0)),
        ]
        inputs_c += [zs.reshape(N, Hout, WC), lane_tile(asc), lane_tile(csc)]
    else:
        in_specs_c.append(pl.BlockSpec((None, TH, WC), lambda n, t: (n, t, 0)))
        inputs_c.append(x_nhwc.reshape(N, Hout, WC))
    out_shape_c = jax.ShapeDtypeStruct((N, Hout, WC), jnp.float32)
    out = pl.pallas_call(
        kernel_c, grid=grid,
        in_specs=in_specs_c,
        out_specs=pl.BlockSpec((None, TH, WC), lambda n, t: (n, t, 0)),
        out_shape=out_shape_c,
        compiler_params=cparams,
        cost_estimate=_cost(6 * N * Hout * WC, inputs_c, [out_shape_c]),
    )(*inputs_c)

    # glue back to the PyTorch NCHW boundary
    return jnp.transpose(out.reshape(N, Hout, Wout, Cout), (0, 3, 1, 2))


# ------------------------------ reference ------------------------------------
def _reference(x_nchw, params, stride):
    def conv(x, w, s, pad):
        return lax.conv_general_dilated(
            x, w, (s, s), [(pad, pad), (pad, pad)],
            dimension_numbers=("NCHW", "OIHW", "NCHW"))

    def bn(x, g, b):
        mean = jnp.mean(x, axis=(0, 2, 3), keepdims=True)
        var = jnp.mean(jnp.square(x - mean), axis=(0, 2, 3), keepdims=True)
        return ((x - mean) * lax.rsqrt(var + EPS) * g.reshape(1, -1, 1, 1)
                + b.reshape(1, -1, 1, 1))

    Cin = x_nchw.shape[1]; Cout = params["w1"].shape[0]
    h = jax.nn.relu(bn(conv(x_nchw, params["w1"], stride, 1), params["g1"], params["b1"]))
    h = bn(conv(h, params["w2"], 1, 1), params["g2"], params["b2"])
    if stride != 1 or Cin != Cout:
        sc = bn(conv(x_nchw, params["ws"], stride, 0), params["gs"], params["bs"])
    else:
        sc = x_nchw
    return jax.nn.relu(h + sc)


def init_params(key, cin, cout, stride):
    ks = jax.random.split(key, 9)
    p = {
        "w1": jax.random.normal(ks[0], (cout, cin, 3, 3), jnp.float32) * (2.0 / (cin * 9)) ** 0.5,
        "g1": 1.0 + 0.1 * jax.random.normal(ks[1], (cout,), jnp.float32),
        "b1": 0.1 * jax.random.normal(ks[2], (cout,), jnp.float32),
        "w2": jax.random.normal(ks[3], (cout, cout, 3, 3), jnp.float32) * (2.0 / (cout * 9)) ** 0.5,
        "g2": 1.0 + 0.1 * jax.random.normal(ks[4], (cout,), jnp.float32),
        "b2": 0.1 * jax.random.normal(ks[5], (cout,), jnp.float32),
    }
    if stride != 1 or cin != cout:
        p["ws"] = jax.random.normal(ks[6], (cout, cin, 1, 1), jnp.float32) * (2.0 / cin) ** 0.5
        p["gs"] = 1.0 + 0.1 * jax.random.normal(ks[7], (cout,), jnp.float32)
        p["bs"] = 0.1 * jax.random.normal(ks[8], (cout,), jnp.float32)
    return p


if __name__ == "__main__":
    key = jax.random.PRNGKey(0)
    kx, kp1, kp2 = jax.random.split(key, 3)
    x = jax.random.normal(kx, (2, 4, 16, 16), jnp.float32)

    fwd = jax.jit(basic_block_forward, static_argnames=("stride",))

    # Case 1: downsampling block (stride=2, 4 -> 8 channels, projection shortcut)
    p1 = init_params(kp1, 4, 8, 2)
    out1 = jax.block_until_ready(fwd(x, p1, stride=2))
    ref1 = _reference(x, p1, 2)
    assert out1.shape == (2, 8, 8, 8)
    # bf16 matmul operands with f32 accumulation -> slightly looser tolerance
    assert jnp.allclose(out1, ref1, atol=2e-2, rtol=2e-2), float(jnp.max(jnp.abs(out1 - ref1)))

    # Case 2: identity-shortcut block (stride=1, 4 -> 4 channels)
    p2 = init_params(kp2, 4, 4, 1)
    out2 = jax.block_until_ready(fwd(x, p2, stride=1))
    ref2 = _reference(x, p2, 1)
    assert out2.shape == (2, 4, 16, 16)
    assert jnp.allclose(out2, ref2, atol=2e-2, rtol=2e-2), float(jnp.max(jnp.abs(out2 - ref2)))

    print("KERNEL_OK")
</pallas_src>

<mosaic_0001>
module attributes {stable_mosaic.version = 11 : i64} {
  func.func @_conv1_kernel(%arg0: i32, %arg1: i32, %arg2: memref<1x18x9x8xf32, #tpu.memory_space<vmem>>, %arg3: memref<36x8xbf16, #tpu.memory_space<vmem>>, %arg4: memref<4x8xbf16, #tpu.memory_space<vmem>>, %arg5: memref<1x8x8x8xf32, #tpu.memory_space<vmem>>, %arg6: memref<1x1x2x8xf32, #tpu.memory_space<vmem>>, %arg7: memref<1x8x8x8xf32, #tpu.memory_space<vmem>>, %arg8: memref<1x1x2x8xf32, #tpu.memory_space<vmem>>) attributes {dimension_semantics = [#tpu.dimension_semantics<parallel>, #tpu.dimension_semantics<parallel>], iteration_bounds = array<i64: 2, 1>, scalar_prefetch = 0 : i64, scratch_operands = 0 : i64, tpu.core_type = #tpu.core_type<tc>, window_params = [{transform_indices = @transform_0, window_bounds = array<i64: 1, 18, 9, 8>}, {pipeline_mode = #tpu.pipeline_mode<synchronous>, transform_indices = @transform_1, window_bounds = array<i64: 36, 8>}, {pipeline_mode = #tpu.pipeline_mode<synchronous>, transform_indices = @transform_2, window_bounds = array<i64: 4, 8>}, {transform_indices = @transform_3, window_bounds = array<i64: 1, 8, 8, 8>}, {transform_indices = @transform_4, window_bounds = array<i64: 1, 1, 2, 8>}, {transform_indices = @transform_5, window_bounds = array<i64: 1, 8, 8, 8>}, {transform_indices = @transform_6, window_bounds = array<i64: 1, 1, 2, 8>}]} {
    %c8_i32 = arith.constant 8 : i32
    %0 = arith.muli %arg1, %c8_i32 : i32
    %1 = tpu.assume_multiple %0, 8 : i32
    %c2_i32 = arith.constant 2 : i32
    %2 = arith.muli %c2_i32, %1 : i32
    %c0_i32 = arith.constant 0 : i32
    %3 = arith.addi %2, %c0_i32 : i32
    %c0 = arith.constant 0 : index
    %4 = arith.index_cast %3 : i32 to index
    %c0_0 = arith.constant 0 : index
    %c0_1 = arith.constant 0 : index
    %5 = tpu.strided_load %arg2[%c0, %4, %c0_0, %c0_1] {strides = array<i32: 1, 2, 1, 1>} : memref<1x18x9x8xf32, #tpu.memory_space<vmem>>, vector<1x8x9x8xf32>
    %6 = vector.shape_cast %5 : vector<1x8x9x8xf32> to vector<8x9x8xf32>
    %7 = vector.extract_strided_slice %6 {offsets = [0, 0, 0], sizes = [8, 8, 8], strides = [1, 1, 1]} : vector<8x9x8xf32> to vector<8x8x8xf32>
    %8 = vector.shape_cast %7 : vector<8x8x8xf32> to vector<64x8xf32>
    %9 = vector.extract_strided_slice %6 {offsets = [0, 1, 0], sizes = [8, 8, 4], strides = [1, 1, 1]} : vector<8x9x8xf32> to vector<8x8x4xf32>
    %10 = vector.shape_cast %9 : vector<8x8x4xf32> to vector<64x4xf32>
    %c2_i32_2 = arith.constant 2 : i32
    %11 = arith.muli %c2_i32_2, %1 : i32
    %c1_i32 = arith.constant 1 : i32
    %12 = arith.addi %11, %c1_i32 : i32
    %c0_3 = arith.constant 0 : index
    %13 = arith.index_cast %12 : i32 to index
    %c0_4 = arith.constant 0 : index
    %c0_5 = arith.constant 0 : index
    %14 = tpu.strided_load %arg2[%c0_3, %13, %c0_4, %c0_5] {strides = array<i32: 1, 2, 1, 1>} : memref<1x18x9x8xf32, #tpu.memory_space<vmem>>, vector<1x8x9x8xf32>
    %15 = vector.shape_cast %14 : vector<1x8x9x8xf32> to vector<8x9x8xf32>
    %16 = vector.extract_strided_slice %15 {offsets = [0, 0, 0], sizes = [8, 8, 8], strides = [1, 1, 1]} : vector<8x9x8xf32> to vector<8x8x8xf32>
    %17 = vector.shape_cast %16 : vector<8x8x8xf32> to vector<64x8xf32>
    %18 = vector.extract_strided_slice %15 {offsets = [0, 1, 0], sizes = [8, 8, 4], strides = [1, 1, 1]} : vector<8x9x8xf32> to vector<8x8x4xf32>
    %19 = vector.shape_cast %18 : vector<8x8x4xf32> to vector<64x4xf32>
    %c2_i32_6 = arith.constant 2 : i32
    %20 = arith.muli %c2_i32_6, %1 : i32
    %c2_i32_7 = arith.constant 2 : i32
    %21 = arith.addi %20, %c2_i32_7 : i32
    %c0_8 = arith.constant 0 : index
    %22 = arith.index_cast %21 : i32 to index
    %c0_9 = arith.constant 0 : index
    %c0_10 = arith.constant 0 : index
    %23 = tpu.strided_load %arg2[%c0_8, %22, %c0_9, %c0_10] {strides = array<i32: 1, 2, 1, 1>} : memref<1x18x9x8xf32, #tpu.memory_space<vmem>>, vector<1x8x9x8xf32>
    %24 = vector.shape_cast %23 : vector<1x8x9x8xf32> to vector<8x9x8xf32>
    %25 = vector.extract_strided_slice %24 {offsets = [0, 0, 0], sizes = [8, 8, 8], strides = [1, 1, 1]} : vector<8x9x8xf32> to vector<8x8x8xf32>
    %26 = vector.shape_cast %25 : vector<8x8x8xf32> to vector<64x8xf32>
    %27 = vector.extract_strided_slice %24 {offsets = [0, 1, 0], sizes = [8, 8, 4], strides = [1, 1, 1]} : vector<8x9x8xf32> to vector<8x8x4xf32>
    %28 = vector.shape_cast %27 : vector<8x8x4xf32> to vector<64x4xf32>
    %29 = tpu.concatenate %8, %10, %17, %19, %26, %28 in 1 : vector<64x8xf32>, vector<64x4xf32>, vector<64x8xf32>, vector<64x4xf32>, vector<64x8xf32>, vector<64x4xf32> -> vector<64x36xf32>
    %30 = arith.truncf %29 : vector<64x36xf32> to vector<64x36xbf16>
    %c0_11 = arith.constant 0 : index
    %c0_12 = arith.constant 0 : index
    %31 = vector.load %arg3[%c0_11, %c0_12] : memref<36x8xbf16, #tpu.memory_space<vmem>>, vector<36x8xbf16>
    %cst = arith.constant dense<0.000000e+00> : vector<64x8xf32>
    %32 = tpu.matmul %30, %31, %cst {dimension_numbers = #tpu.dot_dimension_numbers<[1], [0], [0], [1], [0, 0, 1, 1], [], []>} : vector<64x36xbf16>, vector<36x8xbf16>, vector<64x8xf32> -> vector<64x8xf32>
    %33 = vector.shape_cast %32 : vector<64x8xf32> to vector<8x8x8xf32>
    %c0_13 = arith.constant 0 : index
    %c0_14 = arith.constant 0 : index
    %c0_15 = arith.constant 0 : index
    %c0_16 = arith.constant 0 : index
    %34 = vector.load %arg5[%c0_13, %c0_14, %c0_15, %c0_16] : memref<1x8x8x8xf32, #tpu.memory_space<vmem>>, vector<1x8x8x8xf32>
    %35 = vector.shape_cast %34 : vector<1x8x8x8xf32> to vector<8x8x8xf32>
    %36 = vector.shape_cast %33 : vector<8x8x8xf32> to vector<1x8x8x8xf32>
    tpu.vector_store %arg5[%c0_13, %c0_14, %c0_15, %c0_16], %36 {strides = array<i32>} : memref<1x8x8x8xf32, #tpu.memory_space<vmem>>, vector<1x8x8x8xf32>,
    %cst_17 = arith.constant dense<0.000000e+00> : vector<8xf32>
    %37 = vector.multi_reduction <add>, %32, %cst_17 [0] : vector<64x8xf32> to vector<8xf32>
    %38 = vector.shape_cast %37 : vector<8xf32> to vector<1x8xf32>
    %39 = arith.mulf %32, %32 : vector<64x8xf32>
    %cst_18 = arith.constant dense<0.000000e+00> : vector<8xf32>
    %40 = vector.multi_reduction <add>, %39, %cst_18 [0] : vector<64x8xf32> to vector<8xf32>
    %41 = vector.shape_cast %40 : vector<8xf32> to vector<1x8xf32>
    %42 = tpu.concatenate %38, %41 in 0 : vector<1x8xf32>, vector<1x8xf32> -> vector<2x8xf32>
    %c0_19 = arith.constant 0 : index
    %c0_20 = arith.constant 0 : index
    %c0_21 = arith.constant 0 : index
    %c0_22 = arith.constant 0 : index
    %43 = vector.load %arg6[%c0_19, %c0_20, %c0_21, %c0_22] : memref<1x1x2x8xf32, #tpu.memory_space<vmem>>, vector<1x1x2x8xf32>
    %44 = vector.shape_cast %43 : vector<1x1x2x8xf32> to vector<2x8xf32>
    %45 = vector.shape_cast %42 : vector<2x8xf32> to vector<1x1x2x8xf32>
    tpu.vector_store %arg6[%c0_19, %c0_20, %c0_21, %c0_22], %45 {strides = array<i32>} : memref<1x1x2x8xf32, #tpu.memory_space<vmem>>, vector<1x1x2x8xf32>,
    %c2_i32_23 = arith.constant 2 : i32
    %46 = arith.muli %c2_i32_23, %1 : i32
    %c1_i32_24 = arith.constant 1 : i32
    %47 = arith.addi %46, %c1_i32_24 : i32
    %c0_25 = arith.constant 0 : index
    %48 = arith.index_cast %47 : i32 to index
    %c0_26 = arith.constant 0 : index
    %c0_27 = arith.constant 0 : index
    %49 = tpu.strided_load %arg2[%c0_25, %48, %c0_26, %c0_27] {strides = array<i32: 1, 2, 1, 1>} : memref<1x18x9x8xf32, #tpu.memory_space<vmem>>, vector<1x8x9x8xf32>
    %50 = vector.shape_cast %49 : vector<1x8x9x8xf32> to vector<8x9x8xf32>
    %51 = vector.extract_strided_slice %50 {offsets = [0, 0, 4], sizes = [8, 8, 4], strides = [1, 1, 1]} : vector<8x9x8xf32> to vector<8x8x4xf32>
    %52 = vector.shape_cast %51 : vector<8x8x4xf32> to vector<64x4xf32>
    %53 = arith.truncf %52 : vector<64x4xf32> to vector<64x4xbf16>
    %c0_28 = arith.constant 0 : index
    %c0_29 = arith.constant 0 : index
    %54 = vector.load %arg4[%c0_28, %c0_29] : memref<4x8xbf16, #tpu.memory_space<vmem>>, vector<4x8xbf16>
    %cst_30 = arith.constant dense<0.000000e+00> : vector<64x8xf32>
    %55 = tpu.matmul %53, %54, %cst_30 {dimension_numbers = #tpu.dot_dimension_numbers<[1], [0], [0], [1], [0, 0, 1, 1], [], []>} : vector<64x4xbf16>, vector<4x8xbf16>, vector<64x8xf32> -> vector<64x8xf32>
    %56 = vector.shape_cast %55 : vector<64x8xf32> to vector<8x8x8xf32>
    %c0_31 = arith.constant 0 : index
    %c0_32 = arith.constant 0 : index
    %c0_33 = arith.constant 0 : index
    %c0_34 = arith.constant 0 : index
    %57 = vector.load %arg7[%c0_31, %c0_32, %c0_33, %c0_34] : memref<1x8x8x8xf32, #tpu.memory_space<vmem>>, vector<1x8x8x8xf32>
    %58 = vector.shape_cast %57 : vector<1x8x8x8xf32> to vector<8x8x8xf32>
    %59 = vector.shape_cast %56 : vector<8x8x8xf32> to vector<1x8x8x8xf32>
    tpu.vector_store %arg7[%c0_31, %c0_32, %c0_33, %c0_34], %59 {strides = array<i32>} : memref<1x8x8x8xf32, #tpu.memory_space<vmem>>, vector<1x8x8x8xf32>,
    %cst_35 = arith.constant dense<0.000000e+00> : vector<8xf32>
    %60 = vector.multi_reduction <add>, %55, %cst_35 [0] : vector<64x8xf32> to vector<8xf32>
    %61 = vector.shape_cast %60 : vector<8xf32> to vector<1x8xf32>
    %62 = arith.mulf %55, %55 : vector<64x8xf32>
    %cst_36 = arith.constant dense<0.000000e+00> : vector<8xf32>
    %63 = vector.multi_reduction <add>, %62, %cst_36 [0] : vector<64x8xf32> to vector<8xf32>
    %64 = vector.shape_cast %63 : vector<8xf32> to vector<1x8xf32>
    %65 = tpu.concatenate %61, %64 in 0 : vector<1x8xf32>, vector<1x8xf32> -> vector<2x8xf32>
    %c0_37 = arith.constant 0 : index
    %c0_38 = arith.constant 0 : index
    %c0_39 = arith.constant 0 : index
    %c0_40 = arith.constant 0 : index
    %66 = vector.load %arg8[%c0_37, %c0_38, %c0_39, %c0_40] : memref<1x1x2x8xf32, #tpu.memory_space<vmem>>, vector<1x1x2x8xf32>
    %67 = vector.shape_cast %66 : vector<1x1x2x8xf32> to vector<2x8xf32>
    %68 = vector.shape_cast %65 : vector<2x8xf32> to vector<1x1x2x8xf32>
    tpu.vector_store %arg8[%c0_37, %c0_38, %c0_39, %c0_40], %68 {strides = array<i32>} : memref<1x1x2x8xf32, #tpu.memory_space<vmem>>, vector<1x1x2x8xf32>,
    return
  }
  func.func @transform_0(%arg0: i32, %arg1: i32) -> (i32, i32, i32, i32) {
    %c0_i32 = arith.constant 0 : i32
    %c0_i32_0 = arith.constant 0 : i32
    %c0_i32_1 = arith.constant 0 : i32
    %c0_i32_2 = arith.constant 0 : i32
    return %arg0, %c0_i32, %c0_i32_0, %c0_i32_1 : i32, i32, i32, i32
  }
  func.func @transform_1(%arg0: i32, %arg1: i32) -> (i32, i32) {
    %c0_i32 = arith.constant 0 : i32
    %c0_i32_0 = arith.constant 0 : i32
    %c0_i32_1 = arith.constant 0 : i32
    return %c0_i32, %c0_i32_0 : i32, i32
  }
  func.func @transform_2(%arg0: i32, %arg1: i32) -> (i32, i32) {
    %c0_i32 = arith.constant 0 : i32
    %c0_i32_0 = arith.constant 0 : i32
    %c0_i32_1 = arith.constant 0 : i32
    return %c0_i32, %c0_i32_0 : i32, i32
  }
  func.func @transform_3(%arg0: i32, %arg1: i32) -> (i32, i32, i32, i32) {
    %c0_i32 = arith.constant 0 : i32
    %c0_i32_0 = arith.constant 0 : i32
    %c0_i32_1 = arith.constant 0 : i32
    return %arg0, %arg1, %c0_i32, %c0_i32_0 : i32, i32, i32, i32
  }
  func.func @transform_4(%arg0: i32, %arg1: i32) -> (i32, i32, i32, i32) {
    %c0_i32 = arith.constant 0 : i32
    %c0_i32_0 = arith.constant 0 : i32
    %c0_i32_1 = arith.constant 0 : i32
    return %arg0, %arg1, %c0_i32, %c0_i32_0 : i32, i32, i32, i32
  }
  func.func @transform_5(%arg0: i32, %arg1: i32) -> (i32, i32, i32, i32) {
    %c0_i32 = arith.constant 0 : i32
    %c0_i32_0 = arith.constant 0 : i32
    %c0_i32_1 = arith.constant 0 : i32
    return %arg0, %arg1, %c0_i32, %c0_i32_0 : i32, i32, i32, i32
  }
  func.func @transform_6(%arg0: i32, %arg1: i32) -> (i32, i32, i32, i32) {
    %c0_i32 = arith.constant 0 : i32
    %c0_i32_0 = arith.constant 0 : i32
    %c0_i32_1 = arith.constant 0 : i32
    return %arg0, %arg1, %c0_i32, %c0_i32_0 : i32, i32, i32, i32
  }
}

module attributes {stable_mosaic.version = 11 : i64} {
  func.func @_conv2_kernel(%arg0: i32, %arg1: i32, %arg2: memref<1x8x8x8xf32, #tpu.memory_space<vmem>>, %arg3: memref<1x8xf32, #tpu.memory_space<vmem>>, %arg4: memref<1x8xf32, #tpu.memory_space<vmem>>, %arg5: memref<72x8xbf16, #tpu.memory_space<vmem>>, %arg6: memref<1x8x8x8xf32, #tpu.memory_space<vmem>>, %arg7: memref<1x1x2x8xf32, #tpu.memory_space<vmem>>) attributes {dimension_semantics = [#tpu.dimension_semantics<parallel>, #tpu.dimension_semantics<parallel>], iteration_bounds = array<i64: 2, 1>, scalar_prefetch = 0 : i64, scratch_operands = 0 : i64, tpu.core_type = #tpu.core_type<tc>, window_params = [{transform_indices = @transform_0, window_bounds = array<i64: 1, 8, 8, 8>}, {pipeline_mode = #tpu.pipeline_mode<synchronous>, transform_indices = @transform_1, window_bounds = array<i64: 1, 8>}, {pipeline_mode = #tpu.pipeline_mode<synchronous>, transform_indices = @transform_2, window_bounds = array<i64: 1, 8>}, {pipeline_mode = #tpu.pipeline_mode<synchronous>, transform_indices = @transform_3, window_bounds = array<i64: 72, 8>}, {transform_indices = @transform_4, window_bounds = array<i64: 1, 8, 8, 8>}, {transform_indices = @transform_5, window_bounds = array<i64: 1, 1, 2, 8>}]} {
    %c0 = arith.constant 0 : index
    %c0_0 = arith.constant 0 : index
    %0 = vector.load %arg3[%c0, %c0_0] : memref<1x8xf32, #tpu.memory_space<vmem>>, vector<1x8xf32>
    %c0_1 = arith.constant 0 : index
    %c0_2 = arith.constant 0 : index
    %1 = vector.load %arg4[%c0_1, %c0_2] : memref<1x8xf32, #tpu.memory_space<vmem>>, vector<1x8xf32>
    %c0_3 = arith.constant 0 : index
    %c0_4 = arith.constant 0 : index
    %c0_5 = arith.constant 0 : index
    %c0_6 = arith.constant 0 : index
    %2 = vector.load %arg2[%c0_3, %c0_4, %c0_5, %c0_6] : memref<1x8x8x8xf32, #tpu.memory_space<vmem>>, vector<1x8x8x8xf32>
    %3 = vector.shape_cast %2 : vector<1x8x8x8xf32> to vector<8x8x8xf32>
    %4 = vector.shape_cast %0 : vector<1x8xf32> to vector<1x1x8xf32>
    %5 = vector.broadcast %4 : vector<1x1x8xf32> to vector<8x8x8xf32>
    %6 = arith.mulf %3, %5 : vector<8x8x8xf32>
    %7 = vector.shape_cast %1 : vector<1x8xf32> to vector<1x1x8xf32>
    %8 = vector.broadcast %7 : vector<1x1x8xf32> to vector<8x8x8xf32>
    %9 = arith.addf %6, %8 : vector<8x8x8xf32>
    %cst = arith.constant 0.000000e+00 : f32
    %10 = vector.broadcast %cst : f32 to vector<8x8x8xf32>
    %11 = arith.maximumf %9, %10 : vector<8x8x8xf32>
    %cst_7 = arith.constant 0.000000e+00 : f32
    %12 = vector.broadcast %cst_7 : f32 to vector<1x8x8xf32>
    %13 = tpu.concatenate %12, %11, %12 in 0 : vector<1x8x8xf32>, vector<8x8x8xf32>, vector<1x8x8xf32> -> vector<10x8x8xf32>
    %cst_8 = arith.constant 0.000000e+00 : f32
    %14 = vector.broadcast %cst_8 : f32 to vector<10x1x8xf32>
    %15 = vector.extract_strided_slice %13 {offsets = [0, 0, 0], sizes = [10, 7, 8], strides = [1, 1, 1]} : vector<10x8x8xf32> to vector<10x7x8xf32>
    %16 = tpu.concatenate %14, %15 in 1 : vector<10x1x8xf32>, vector<10x7x8xf32> -> vector<10x8x8xf32>
    %17 = vector.extract_strided_slice %13 {offsets = [0, 1, 0], sizes = [10, 7, 8], strides = [1, 1, 1]} : vector<10x8x8xf32> to vector<10x7x8xf32>
    %18 = tpu.concatenate %17, %14 in 1 : vector<10x7x8xf32>, vector<10x1x8xf32> -> vector<10x8x8xf32>
    %19 = vector.extract_strided_slice %16 {offsets = [0, 0, 0], sizes = [8, 8, 8], strides = [1, 1, 1]} : vector<10x8x8xf32> to vector<8x8x8xf32>
    %20 = vector.shape_cast %19 : vector<8x8x8xf32> to vector<64x8xf32>
    %21 = vector.extract_strided_slice %13 {offsets = [0, 0, 0], sizes = [8, 8, 8], strides = [1, 1, 1]} : vector<10x8x8xf32> to vector<8x8x8xf32>
    %22 = vector.shape_cast %21 : vector<8x8x8xf32> to vector<64x8xf32>
    %23 = vector.extract_strided_slice %18 {offsets = [0, 0, 0], sizes = [8, 8, 8], strides = [1, 1, 1]} : vector<10x8x8xf32> to vector<8x8x8xf32>
    %24 = vector.shape_cast %23 : vector<8x8x8xf32> to vector<64x8xf32>
    %25 = vector.extract_strided_slice %16 {offsets = [1, 0, 0], sizes = [8, 8, 8], strides = [1, 1, 1]} : vector<10x8x8xf32> to vector<8x8x8xf32>
    %26 = vector.shape_cast %25 : vector<8x8x8xf32> to vector<64x8xf32>
    %27 = vector.extract_strided_slice %13 {offsets = [1, 0, 0], sizes = [8, 8, 8], strides = [1, 1, 1]} : vector<10x8x8xf32> to vector<8x8x8xf32>
    %28 = vector.shape_cast %27 : vector<8x8x8xf32> to vector<64x8xf32>
    %29 = vector.extract_strided_slice %18 {offsets = [1, 0, 0], sizes = [8, 8, 8], strides = [1, 1, 1]} : vector<10x8x8xf32> to vector<8x8x8xf32>
    %30 = vector.shape_cast %29 : vector<8x8x8xf32> to vector<64x8xf32>
    %31 = vector.extract_strided_slice %16 {offsets = [2, 0, 0], sizes = [8, 8, 8], strides = [1, 1, 1]} : vector<10x8x8xf32> to vector<8x8x8xf32>
    %32 = vector.shape_cast %31 : vector<8x8x8xf32> to vector<64x8xf32>
    %33 = vector.extract_strided_slice %13 {offsets = [2, 0, 0], sizes = [8, 8, 8], strides = [1, 1, 1]} : vector<10x8x8xf32> to vector<8x8x8xf32>
    %34 = vector.shape_cast %33 : vector<8x8x8xf32> to vector<64x8xf32>
    %35 = vector.extract_strided_slice %18 {offsets = [2, 0, 0], sizes = [8, 8, 8], strides = [1, 1, 1]} : vector<10x8x8xf32> to vector<8x8x8xf32>
    %36 = vector.shape_cast %35 : vector<8x8x8xf32> to vector<64x8xf32>
    %37 = tpu.concatenate %20, %22, %24, %26, %28, %30, %32, %34, %36 in 1 : vector<64x8xf32>, vector<64x8xf32>, vector<64x8xf32>, vector<64x8xf32>, vector<64x8xf32>, vector<64x8xf32>, vector<64x8xf32>, vector<64x8xf32>, vector<64x8xf32> -> vector<64x72xf32>
    %38 = arith.truncf %37 : vector<64x72xf32> to vector<64x72xbf16>
    %c0_9 = arith.constant 0 : index
    %c0_10 = arith.constant 0 : index
    %39 = vector.load %arg5[%c0_9, %c0_10] : memref<72x8xbf16, #tpu.memory_space<vmem>>, vector<72x8xbf16>
    %cst_11 = arith.constant dense<0.000000e+00> : vector<64x8xf32>
    %40 = tpu.matmul %38, %39, %cst_11 {dimension_numbers = #tpu.dot_dimension_numbers<[1], [0], [0], [1], [0, 0, 1, 1], [], []>} : vector<64x72xbf16>, vector<72x8xbf16>, vector<64x8xf32> -> vector<64x8xf32>
    %41 = vector.shape_cast %40 : vector<64x8xf32> to vector<8x8x8xf32>
    %c0_12 = arith.constant 0 : index
    %c0_13 = arith.constant 0 : index
    %c0_14 = arith.constant 0 : index
    %c0_15 = arith.constant 0 : index
    %42 = vector.load %arg6[%c0_12, %c0_13, %c0_14, %c0_15] : memref<1x8x8x8xf32, #tpu.memory_space<vmem>>, vector<1x8x8x8xf32>
    %43 = vector.shape_cast %42 : vector<1x8x8x8xf32> to vector<8x8x8xf32>
    %44 = vector.shape_cast %41 : vector<8x8x8xf32> to vector<1x8x8x8xf32>
    tpu.vector_store %arg6[%c0_12, %c0_13, %c0_14, %c0_15], %44 {strides = array<i32>} : memref<1x8x8x8xf32, #tpu.memory_space<vmem>>, vector<1x8x8x8xf32>,
    %cst_16 = arith.constant dense<0.000000e+00> : vector<8xf32>
    %45 = vector.multi_reduction <add>, %40, %cst_16 [0] : vector<64x8xf32> to vector<8xf32>
    %46 = vector.shape_cast %45 : vector<8xf32> to vector<1x8xf32>
    %47 = arith.mulf %40, %40 : vector<64x8xf32>
    %cst_17 = arith.constant dense<0.000000e+00> : vector<8xf32>
    %48 = vector.multi_reduction <add>, %47, %cst_17 [0] : vector<64x8xf32> to vector<8xf32>
    %49 = vector.shape_cast %48 : vector<8xf32> to vector<1x8xf32>
    %50 = tpu.concatenate %46, %49 in 0 : vector<1x8xf32>, vector<1x8xf32> -> vector<2x8xf32>
    %c0_18 = arith.constant 0 : index
    %c0_19 = arith.constant 0 : index
    %c0_20 = arith.constant 0 : index
    %c0_21 = arith.constant 0 : index
    %51 = vector.load %arg7[%c0_18, %c0_19, %c0_20, %c0_21] : memref<1x1x2x8xf32, #tpu.memory_space<vmem>>, vector<1x1x2x8xf32>
    %52 = vector.shape_cast %51 : vector<1x1x2x8xf32> to vector<2x8xf32>
    %53 = vector.shape_cast %50 : vector<2x8xf32> to vector<1x1x2x8xf32>
    tpu.vector_store %arg7[%c0_18, %c0_19, %c0_20, %c0_21], %53 {strides = array<i32>} : memref<1x1x2x8xf32, #tpu.memory_space<vmem>>, vector<1x1x2x8xf32>,
    return
  }
  func.func @transform_0(%arg0: i32, %arg1: i32) -> (i32, i32, i32, i32) {
    %c0_i32 = arith.constant 0 : i32
    %c0_i32_0 = arith.constant 0 : i32
    %c0_i32_1 = arith.constant 0 : i32
    %c0_i32_2 = arith.constant 0 : i32
    return %arg0, %c0_i32, %c0_i32_0, %c0_i32_1 : i32, i32, i32, i32
  }
  func.func @transform_1(%arg0: i32, %arg1: i32) -> (i32, i32) {
    %c0_i32 = arith.constant 0 : i32
    %c0_i32_0 = arith.constant 0 : i32
    %c0_i32_1 = arith.constant 0 : i32
    return %c0_i32, %c0_i32_0 : i32, i32
  }
  func.func @transform_2(%arg0: i32, %arg1: i32) -> (i32, i32) {
    %c0_i32 = arith.constant 0 : i32
    %c0_i32_0 = arith.constant 0 : i32
    %c0_i32_1 = arith.constant 0 : i32
    return %c0_i32, %c0_i32_0 : i32, i32
  }
  func.func @transform_3(%arg0: i32, %arg1: i32) -> (i32, i32) {
    %c0_i32 = arith.constant 0 : i32
    %c0_i32_0 = arith.constant 0 : i32
    %c0_i32_1 = arith.constant 0 : i32
    return %c0_i32, %c0_i32_0 : i32, i32
  }
  func.func @transform_4(%arg0: i32, %arg1: i32) -> (i32, i32, i32, i32) {
    %c0_i32 = arith.constant 0 : i32
    %c0_i32_0 = arith.constant 0 : i32
    %c0_i32_1 = arith.constant 0 : i32
    return %arg0, %arg1, %c0_i32, %c0_i32_0 : i32, i32, i32, i32
  }
  func.func @transform_5(%arg0: i32, %arg1: i32) -> (i32, i32, i32, i32) {
    %c0_i32 = arith.constant 0 : i32
    %c0_i32_0 = arith.constant 0 : i32
    %c0_i32_1 = arith.constant 0 : i32
    return %arg0, %arg1, %c0_i32, %c0_i32_0 : i32, i32, i32, i32
  }
}

module attributes {stable_mosaic.version = 11 : i64} {
  func.func @_finalize_kernel(%arg0: i32, %arg1: i32, %arg2: memref<1x8x64xf32, #tpu.memory_space<vmem>>, %arg3: memref<1x64xf32, #tpu.memory_space<vmem>>, %arg4: memref<1x64xf32, #tpu.memory_space<vmem>>, %arg5: memref<1x8x64xf32, #tpu.memory_space<vmem>>, %arg6: memref<1x64xf32, #tpu.memory_space<vmem>>, %arg7: memref<1x64xf32, #tpu.memory_space<vmem>>, %arg8: memref<1x8x64xf32, #tpu.memory_space<vmem>>) attributes {dimension_semantics = [#tpu.dimension_semantics<parallel>, #tpu.dimension_semantics<parallel>], iteration_bounds = array<i64: 2, 1>, scalar_prefetch = 0 : i64, scratch_operands = 0 : i64, tpu.core_type = #tpu.core_type<tc>, window_params = [{transform_indices = @transform_0, window_bounds = array<i64: 1, 8, 64>}, {pipeline_mode = #tpu.pipeline_mode<synchronous>, transform_indices = @transform_1, window_bounds = array<i64: 1, 64>}, {pipeline_mode = #tpu.pipeline_mode<synchronous>, transform_indices = @transform_2, window_bounds = array<i64: 1, 64>}, {transform_indices = @transform_3, window_bounds = array<i64: 1, 8, 64>}, {pipeline_mode = #tpu.pipeline_mode<synchronous>, transform_indices = @transform_4, window_bounds = array<i64: 1, 64>}, {pipeline_mode = #tpu.pipeline_mode<synchronous>, transform_indices = @transform_5, window_bounds = array<i64: 1, 64>}, {transform_indices = @transform_6, window_bounds = array<i64: 1, 8, 64>}]} {
    %c0 = arith.constant 0 : index
    %c0_0 = arith.constant 0 : index
    %c0_1 = arith.constant 0 : index
    %0 = vector.load %arg2[%c0, %c0_0, %c0_1] : memref<1x8x64xf32, #tpu.memory_space<vmem>>, vector<1x8x64xf32>
    %1 = vector.shape_cast %0 : vector<1x8x64xf32> to vector<8x64xf32>
    %c0_2 = arith.constant 0 : index
    %c0_3 = arith.constant 0 : index
    %2 = vector.load %arg3[%c0_2, %c0_3] : memref<1x64xf32, #tpu.memory_space<vmem>>, vector<1x64xf32>
    %3 = vector.broadcast %2 : vector<1x64xf32> to vector<8x64xf32>
    %4 = arith.mulf %1, %3 : vector<8x64xf32>
    %c0_4 = arith.constant 0 : index
    %c0_5 = arith.constant 0 : index
    %5 = vector.load %arg4[%c0_4, %c0_5] : memref<1x64xf32, #tpu.memory_space<vmem>>, vector<1x64xf32>
    %6 = vector.broadcast %5 : vector<1x64xf32> to vector<8x64xf32>
    %7 = arith.addf %4, %6 : vector<8x64xf32>
    %c0_6 = arith.constant 0 : index
    %c0_7 = arith.constant 0 : index
    %c0_8 = arith.constant 0 : index
    %8 = vector.load %arg5[%c0_6, %c0_7, %c0_8] : memref<1x8x64xf32, #tpu.memory_space<vmem>>, vector<1x8x64xf32>
    %9 = vector.shape_cast %8 : vector<1x8x64xf32> to vector<8x64xf32>
    %c0_9 = arith.constant 0 : index
    %c0_10 = arith.constant 0 : index
    %10 = vector.load %arg6[%c0_9, %c0_10] : memref<1x64xf32, #tpu.memory_space<vmem>>, vector<1x64xf32>
    %11 = vector.broadcast %10 : vector<1x64xf32> to vector<8x64xf32>
    %12 = arith.mulf %9, %11 : vector<8x64xf32>
    %c0_11 = arith.constant 0 : index
    %c0_12 = arith.constant 0 : index
    %13 = vector.load %arg7[%c0_11, %c0_12] : memref<1x64xf32, #tpu.memory_space<vmem>>, vector<1x64xf32>
    %14 = vector.broadcast %13 : vector<1x64xf32> to vector<8x64xf32>
    %15 = arith.addf %12, %14 : vector<8x64xf32>
    %16 = arith.addf %7, %15 : vector<8x64xf32>
    %cst = arith.constant 0.000000e+00 : f32
    %17 = vector.broadcast %cst : f32 to vector<8x64xf32>
    %18 = arith.maximumf %16, %17 : vector<8x64xf32>
    %c0_13 = arith.constant 0 : index
    %c0_14 = arith.constant 0 : index
    %c0_15 = arith.constant 0 : index
    %19 = vector.load %arg8[%c0_13, %c0_14, %c0_15] : memref<1x8x64xf32, #tpu.memory_space<vmem>>, vector<1x8x64xf32>
    %20 = vector.shape_cast %19 : vector<1x8x64xf32> to vector<8x64xf32>
    %21 = vector.shape_cast %18 : vector<8x64xf32> to vector<1x8x64xf32>
    tpu.vector_store %arg8[%c0_13, %c0_14, %c0_15], %21 {strides = array<i32>} : memref<1x8x64xf32, #tpu.memory_space<vmem>>, vector<1x8x64xf32>,
    return
  }
  func.func @transform_0(%arg0: i32, %arg1: i32) -> (i32, i32, i32) {
    %c0_i32 = arith.constant 0 : i32
    %c0_i32_0 = arith.constant 0 : i32
    return %arg0, %arg1, %c0_i32 : i32, i32, i32
  }
  func.func @transform_1(%arg0: i32, %arg1: i32) -> (i32, i32) {
    %c0_i32 = arith.constant 0 : i32
    %c0_i32_0 = arith.constant 0 : i32
    %c0_i32_1 = arith.constant 0 : i32
    return %c0_i32, %c0_i32_0 : i32, i32
  }
  func.func @transform_2(%arg0: i32, %arg1: i32) -> (i32, i32) {
    %c0_i32 = arith.constant 0 : i32
    %c0_i32_0 = arith.constant 0 : i32
    %c0_i32_1 = arith.constant 0 : i32
    return %c0_i32, %c0_i32_0 : i32, i32
  }
  func.func @transform_3(%arg0: i32, %arg1: i32) -> (i32, i32, i32) {
    %c0_i32 = arith.constant 0 : i32
    %c0_i32_0 = arith.constant 0 : i32
    return %arg0, %arg1, %c0_i32 : i32, i32, i32
  }
  func.func @transform_4(%arg0: i32, %arg1: i32) -> (i32, i32) {
    %c0_i32 = arith.constant 0 : i32
    %c0_i32_0 = arith.constant 0 : i32
    %c0_i32_1 = arith.constant 0 : i32
    return %c0_i32, %c0_i32_0 : i32, i32
  }
  func.func @transform_5(%arg0: i32, %arg1: i32) -> (i32, i32) {
    %c0_i32 = arith.constant 0 : i32
    %c0_i32_0 = arith.constant 0 : i32
    %c0_i32_1 = arith.constant 0 : i32
    return %c0_i32, %c0_i32_0 : i32, i32
  }
  func.func @transform_6(%arg0: i32, %arg1: i32) -> (i32, i32, i32) {
    %c0_i32 = arith.constant 0 : i32
    %c0_i32_0 = arith.constant 0 : i32
    return %arg0, %arg1, %c0_i32 : i32, i32, i32
  }
}

</mosaic_0001>

<llo_original>
// kernel: basic_block_forward.5
$region0: #{basic_block_forward.5}
  #allocation0 [shape = 'u32[]', space=smem, size = 0x4, offset = 0x4, fixed_abs, tag = 'smem constant byte address 0x4 - core index']
  #allocation1 [shape = 'u32[72,128]{1,0:T(1,128)}', space=vmem, size = 0x9000, scoped, tag = 'internal scratch']
  %s0 = inlined_call_operand.vmem [shape: f32[2,8,64], index: 0, kind: input, shape index: {}]
  %s1 = inlined_call_operand.vmem [shape: f32[1,64], index: 1, kind: input, shape index: {}]
  %s2 = inlined_call_operand.vmem [shape: f32[1,64], index: 2, kind: input, shape index: {}]
  %s3 = inlined_call_operand.vmem [shape: f32[2,8,64], index: 3, kind: input, shape index: {}]
  %s4 = inlined_call_operand.vmem [shape: f32[1,64], index: 4, kind: input, shape index: {}]
  %s5 = inlined_call_operand.vmem [shape: f32[1,64], index: 5, kind: input, shape index: {}]
  %s6 = inlined_call_operand.vmem [shape: f32[2,8,64], index: 6, kind: output, shape index: {}]
  %s7 = sld [smem:[#allocation0]]
  $region57: #{basic_block_forward.5} parent=0
    _
  %s9 = ssub.s32 1, %s7
  %s10 = scalar_select 0, %s9, %s7
  loop: start=0, step=1, limit=4
  $region2: #{basic_block_forward.5} parent=0 // loop_pre_header
    _
  $region3: #{basic_block_forward.5} parent=0 // loop_header
    %s12 = sphi 0, %s16
    %p13 = scmp.ge.s32.totalorder %s12, 4
    %s19 = sphi 0, %s31
    %s20 = sphi 0, %s27
    %s21 = sphi 0, %s19
    %s22 = sphi 0, %s20
    %s23 = sphi 0, %s21
    %s24 = sphi 0, %s22
    %s36 = sphi 0, %s38
    %s39 = sphi 0, %s36
    %s40 = sphi 0, %s39
    %s56 = sphi 0, %s40
    %s60 = sphi 0, %s60
    %s62 = sphi 0, %s60
    %s63 = sphi 0, %s62
    %s77 = sphi 0, %s63
    %s81 = sphi 0, %s81
    %s83 = sphi 0, %s81
    %s84 = sphi 0, %s83
    %s98 = sphi 0, %s84
    %s106 = sphi 0, %s108
    %s109 = sphi 0, %s106
    %s110 = sphi 0, %s109
    %s126 = sphi 0, %s110
    %s130 = sphi 0, %s130
    %s132 = sphi 0, %s130
    %s133 = sphi 0, %s132
    %s147 = sphi 0, %s133
    %s151 = sphi 0, %s151
    %s153 = sphi 0, %s151
    %s154 = sphi 0, %s153
    %s168 = sphi 0, %s154
    %s176 = sphi 0, %s178
    %s179 = sphi 0, %s176
    %s180 = sphi 0, %s179
    %s196 = sphi 0, %s180
  $region4: #{basic_block_forward.5} parent=0 // loop_header_branch
    %15 = sbr.rel (%p13) target = $region8
  $region5: #{basic_block_forward.5} parent=0 // loop_body
    %s17 = ssub.s32 %s12, 1
    %s18 = ssub.s32 %s12, 2
    %s25 = sadd.s32 1, %s20
    %p26 = scmp.ge.s32.totalorder %s25, 1
    %s27 = scalar_select %p26, 0, %s25
    %s28 = sadd.s32 1, %s19
    %s29 = scalar_select %p26, %s28, %s19
    %p30 = scmp.ge.s32.totalorder %s29, 2
    %s31 = scalar_select %p30, 0, %s29
    %s32 = ssub.s32 %s19, %s31
    %s33 = ssub.s32 %s20, %s27
    %s34 = sor.u32 %s32, %s33
    %p35 = scmp.eq.s32.totalorder %s34, 0
    %s37 = sadd.s32 %s36, 1
    %s38 = scalar_select %p35, %s36, %s37
    %p41 = pneg %p35
    %p42 = scmp.eq.s32.totalorder %s12, 1
    %p43 = por %p41, %p42
    %p44 = scmp.ne.s32.totalorder %s36, %s39
    %p45 = scmp.eq.s32.totalorder %s12, 0
    %p46 = por %p44, %p45
    %p47 = scmp.ne.s32.totalorder %s36, %s39
    %p48 = scmp.eq.s32.totalorder %s17, 1
    %p49 = por %p47, %p48
    %p50 = scmp.ne.s32.totalorder %s39, %s40
    %p51 = scmp.eq.s32.totalorder %s17, 0
    %p52 = por %p50, %p51
    %p53 = scmp.ne.s32.totalorder %s39, %s40
    %p54 = scmp.eq.s32.totalorder %s18, 1
    %p55 = por %p53, %p54
    %p57 = scmp.ne.s32.totalorder %s40, %s56
    %p58 = scmp.eq.s32.totalorder %s18, 0
    %p59 = por %p57, %p58
    %s61 = sadd.s32 %s60, 1
    %p64 = scmp.eq.s32.totalorder %s12, 1
    %p65 = scmp.ne.s32.totalorder %s60, %s62
    %p66 = scmp.eq.s32.totalorder %s12, 0
    %p67 = por %p65, %p66
    %p68 = scmp.ne.s32.totalorder %s60, %s62
    %p69 = scmp.eq.s32.totalorder %s17, 1
    %p70 = por %p68, %p69
    %p71 = scmp.ne.s32.totalorder %s62, %s63
    %p72 = scmp.eq.s32.totalorder %s17, 0
    %p73 = por %p71, %p72
    %p74 = scmp.ne.s32.totalorder %s62, %s63
    %p75 = scmp.eq.s32.totalorder %s18, 1
    %p76 = por %p74, %p75
    %p78 = scmp.ne.s32.totalorder %s63, %s77
    %p79 = scmp.eq.s32.totalorder %s18, 0
    %p80 = por %p78, %p79
    %s82 = sadd.s32 %s81, 1
    %p85 = scmp.eq.s32.totalorder %s12, 1
    %p86 = scmp.ne.s32.totalorder %s81, %s83
    %p87 = scmp.eq.s32.totalorder %s12, 0
    %p88 = por %p86, %p87
    %p89 = scmp.ne.s32.totalorder %s81, %s83
    %p90 = scmp.eq.s32.totalorder %s17, 1
    %p91 = por %p89, %p90
    %p92 = scmp.ne.s32.totalorder %s83, %s84
    %p93 = scmp.eq.s32.totalorder %s17, 0
    %p94 = por %p92, %p93
    %p95 = scmp.ne.s32.totalorder %s83, %s84
    %p96 = scmp.eq.s32.totalorder %s18, 1
    %p97 = por %p95, %p96
    %p99 = scmp.ne.s32.totalorder %s84, %s98
    %p100 = scmp.eq.s32.totalorder %s18, 0
    %p101 = por %p99, %p100
    %s102 = ssub.s32 %s19, %s31
    %s103 = ssub.s32 %s20, %s27
    %s104 = sor.u32 %s102, %s103
    %p105 = scmp.eq.s32.totalorder %s104, 0
    %s107 = sadd.s32 %s106, 1
    %s108 = scalar_select %p105, %s106, %s107
    %p111 = pneg %p105
    %p112 = scmp.eq.s32.totalorder %s12, 1
    %p113 = por %p111, %p112
    %p114 = scmp.ne.s32.totalorder %s106, %s109
    %p115 = scmp.eq.s32.totalorder %s12, 0
    %p116 = por %p114, %p115
    %p117 = scmp.ne.s32.totalorder %s106, %s109
    %p118 = scmp.eq.s32.totalorder %s17, 1
    %p119 = por %p117, %p118
    %p120 = scmp.ne.s32.totalorder %s109, %s110
    %p121 = scmp.eq.s32.totalorder %s17, 0
    %p122 = por %p120, %p121
    %p123 = scmp.ne.s32.totalorder %s109, %s110
    %p124 = scmp.eq.s32.totalorder %s18, 1
    %p125 = por %p123, %p124
    %p127 = scmp.ne.s32.totalorder %s110, %s126
    %p128 = scmp.eq.s32.totalorder %s18, 0
    %p129 = por %p127, %p128
    %s131 = sadd.s32 %s130, 1
    %p134 = scmp.eq.s32.totalorder %s12, 1
    %p135 = scmp.ne.s32.totalorder %s130, %s132
    %p136 = scmp.eq.s32.totalorder %s12, 0
    %p137 = por %p135, %p136
    %p138 = scmp.ne.s32.totalorder %s130, %s132
    %p139 = scmp.eq.s32.totalorder %s17, 1
    %p140 = por %p138, %p139
    %p141 = scmp.ne.s32.totalorder %s132, %s133
    %p142 = scmp.eq.s32.totalorder %s17, 0
    %p143 = por %p141, %p142
    %p144 = scmp.ne.s32.totalorder %s132, %s133
    %p145 = scmp.eq.s32.totalorder %s18, 1
    %p146 = por %p144, %p145
    %p148 = scmp.ne.s32.totalorder %s133, %s147
    %p149 = scmp.eq.s32.totalorder %s18, 0
    %p150 = por %p148, %p149
    %s152 = sadd.s32 %s151, 1
    %p155 = scmp.eq.s32.totalorder %s12, 1
    %p156 = scmp.ne.s32.totalorder %s151, %s153
    %p157 = scmp.eq.s32.totalorder %s12, 0
    %p158 = por %p156, %p157
    %p159 = scmp.ne.s32.totalorder %s151, %s153
    %p160 = scmp.eq.s32.totalorder %s17, 1
    %p161 = por %p159, %p160
    %p162 = scmp.ne.s32.totalorder %s153, %s154
    %p163 = scmp.eq.s32.totalorder %s17, 0
    %p164 = por %p162, %p163
    %p165 = scmp.ne.s32.totalorder %s153, %s154
    %p166 = scmp.eq.s32.totalorder %s18, 1
    %p167 = por %p165, %p166
    %p169 = scmp.ne.s32.totalorder %s154, %s168
    %p170 = scmp.eq.s32.totalorder %s18, 0
    %p171 = por %p169, %p170
    %s172 = ssub.s32 %s19, %s31
    %s173 = ssub.s32 %s20, %s27
    %s174 = sor.u32 %s172, %s173
    %p175 = scmp.eq.s32.totalorder %s174, 0
    %s177 = sadd.s32 %s176, 1
    %s178 = scalar_select %p175, %s176, %s177
    %p181 = pneg %p175
    %p182 = scmp.eq.s32.totalorder %s12, 1
    %p183 = por %p181, %p182
    %p184 = scmp.ne.s32.totalorder %s176, %s179
    %p185 = scmp.eq.s32.totalorder %s12, 0
    %p186 = por %p184, %p185
    %p187 = scmp.ne.s32.totalorder %s176, %s179
    %p188 = scmp.eq.s32.totalorder %s17, 1
    %p189 = por %p187, %p188
    %p190 = scmp.ne.s32.totalorder %s179, %s180
    %p191 = scmp.eq.s32.totalorder %s17, 0
    %p192 = por %p190, %p191
    %p193 = scmp.ne.s32.totalorder %s179, %s180
    %p194 = scmp.eq.s32.totalorder %s18, 1
    %p195 = por %p193, %p194
    %p197 = scmp.ne.s32.totalorder %s180, %s196
    %p198 = scmp.eq.s32.totalorder %s18, 0
    %p199 = por %p197, %p198
    %p200 = scmp.le.s32.totalorder 1, %s12
    %p201 = scmp.lt.s32.totalorder %s12, 3
    %p202 = pnand %p200, %p201
    %p203 = pneg %p202
    // Predicated region
    $region9: #{basic_block_forward.5} parent=5 // pred_check
      _
    $region10: #{basic_block_forward.5} parent=5 // pred_check_branch
      %205 = sbr.rel (%p202) target = $region12
    $region11: #{basic_block_forward.5} parent=5 // pred_region
      %s206 = ssub.s32 %s12, 1
      // Predicated region
      $region13: #{basic_block_forward.5} parent=11 // pred_check
        %p207 = pneg %p73
      $region14: #{basic_block_forward.5} parent=11 // pred_check_branch
        %209 = sbr.rel (%p207) target = $region16
      $region15: #{basic_block_forward.5} parent=11 // pred_region
        _
      $region16: #{basic_block_forward.5} parent=11 // pred_fallthru
        _
      // Predicated region
      $region17: #{basic_block_forward.5} parent=11 // pred_check
        %p210 = pneg %p94
      $region18: #{basic_block_forward.5} parent=11 // pred_check_branch
        %212 = sbr.rel (%p210) target = $region20
      $region19: #{basic_block_forward.5} parent=11 // pred_region
        _
      $region20: #{basic_block_forward.5} parent=11 // pred_fallthru
        _
      // Predicated region
      $region21: #{basic_block_forward.5} parent=11 // pred_check
        %p213 = pneg %p143
      $region22: #{basic_block_forward.5} parent=11 // pred_check_branch
        %215 = sbr.rel (%p213) target = $region24
      $region23: #{basic_block_forward.5} parent=11 // pred_region
        _
      $region24: #{basic_block_forward.5} parent=11 // pred_fallthru
        _
      // Predicated region
      $region25: #{basic_block_forward.5} parent=11 // pred_check
        %p216 = pneg %p164
      $region26: #{basic_block_forward.5} parent=11 // pred_check_branch
        %218 = sbr.rel (%p216) target = $region28
      $region27: #{basic_block_forward.5} parent=11 // pred_region
        _
      $region28: #{basic_block_forward.5} parent=11 // pred_fallthru
        _
    $region12: #{basic_block_forward.5} parent=5 // pred_fallthru
      _
    %p219 = scmp.lt.s32.totalorder %s12, 2
    // Predicated region
    $region29: #{basic_block_forward.5} parent=5 // pred_check
      %p220 = pneg %p219
    $region30: #{basic_block_forward.5} parent=5 // pred_check_branch
      %222 = sbr.rel (%p220) target = $region32
    $region31: #{basic_block_forward.5} parent=5 // pred_region
      // Predicated region
      $region33: #{basic_block_forward.5} parent=31 // pred_check
        %p223 = pneg %p46
      $region34: #{basic_block_forward.5} parent=31 // pred_check_branch
        %225 = sbr.rel (%p223) target = $region36
      $region35: #{basic_block_forward.5} parent=31 // pred_region
        %p226 = scmp.lt.s32.totalorder %s19, 1
        %s227 = scalar_select %p226, %s19, 1
        %p228 = scmp.lt.s32.totalorder %s20, 0
        %s229 = scalar_select %p228, %s20, 0
        %s230 = sadd.s32 %s229, %s227
        %s231 = smul.addr %s230, 8
        %s232 = scalar_lea.vmem %s0, %s231
      $region36: #{basic_block_forward.5} parent=31 // pred_fallthru
        _
      // Predicated region
      $region37: #{basic_block_forward.5} parent=31 // pred_check
        %p233 = pneg %p116
      $region38: #{basic_block_forward.5} parent=31 // pred_check_branch
        %235 = sbr.rel (%p233) target = $region40
      $region39: #{basic_block_forward.5} parent=31 // pred_region
        %p236 = scmp.lt.s32.totalorder %s19, 1
        %s237 = scalar_select %p236, %s19, 1
        %p238 = scmp.lt.s32.totalorder %s20, 0
        %s239 = scalar_select %p238, %s20, 0
        %s240 = sadd.s32 %s239, %s237
        %s241 = smul.addr %s240, 8
        %s242 = scalar_lea.vmem %s3, %s241
      $region40: #{basic_block_forward.5} parent=31 // pred_fallthru
        _
    $region32: #{basic_block_forward.5} parent=5 // pred_fallthru
      _
    %p243 = scmp.le.s32.totalorder 1, %s12
    %p244 = scmp.lt.s32.totalorder %s12, 3
    %p245 = pnand %p243, %p244
    %p246 = pneg %p245
    // Predicated region
    $region41: #{basic_block_forward.5} parent=5 // pred_check
      _
    $region42: #{basic_block_forward.5} parent=5 // pred_check_branch
      %248 = sbr.rel (%p245) target = $region44
    $region43: #{basic_block_forward.5} parent=5 // pred_region
      %s249 = ssub.s32 %s12, 1
      %p250 = scmp.lt.s32.totalorder %s21, 1
      %s251 = scalar_select %p250, %s21, 1
      %p252 = scmp.lt.s32.totalorder %s22, 0
      %s253 = scalar_select %p252, %s22, 0
      %s254 = sadd.s32 %s253, %s251
      %s255 = smul.addr %s254, 8
      %s256 = scalar_lea.vmem %s0, %s255
      %p257 = pneg %p52
      %p258 = pneg %p49
      %p259 = pneg %p73
      %p260 = pneg %p70
      %p261 = pneg %p94
      %p262 = pneg %p91
      %p263 = scmp.lt.s32.totalorder %s21, 1
      %s264 = scalar_select %p263, %s21, 1
      %p265 = scmp.lt.s32.totalorder %s22, 0
      %s266 = scalar_select %p265, %s22, 0
      %s267 = sadd.s32 %s266, %s264
      %s268 = smul.addr %s267, 8
      %s269 = scalar_lea.vmem %s3, %s268
      %p270 = pneg %p122
      %p271 = pneg %p119
      %p272 = pneg %p143
      %p273 = pneg %p140
      %p274 = pneg %p164
      %p275 = pneg %p161
      %p276 = pneg %p192
      %p277 = pneg %p189
      %p278 = scmp.lt.s32.totalorder %s21, 1
      %s279 = scalar_select %p278, %s21, 1
      %p280 = scmp.lt.s32.totalorder %s22, 0
      %s281 = scalar_select %p280, %s22, 0
      %s282 = sadd.s32 %s281, %s279
      %s283 = smul.addr %s282, 8
      %s284 = scalar_lea.vmem %s6, %s283
      %p285 = scmp.lt.s32.totalorder %s21, 1
      %s286 = scalar_select %p285, %s21, 1
      %p287 = scmp.lt.s32.totalorder %s22, 0
      %s288 = scalar_select %p287, %s22, 0
      %s289 = sadd.s32 %s288, %s286
      %s290 = smul.addr %s289, 8
      %s291 = scalar_lea.vmem %s0, %s290
      %p292 = scmp.lt.s32.totalorder %s21, 1
      %s293 = scalar_select %p292, %s21, 1
      %p294 = scmp.lt.s32.totalorder %s22, 0
      %s295 = scalar_select %p294, %s22, 0
      %s296 = sadd.s32 %s295, %s293
      %s297 = smul.addr %s296, 8
      %s298 = scalar_lea.vmem %s3, %s297
      %p299 = scmp.lt.s32.totalorder %s21, 1
      %s300 = scalar_select %p299, %s21, 1
      %p301 = scmp.lt.s32.totalorder %s22, 0
      %s302 = scalar_select %p301, %s22, 0
      %s303 = sadd.s32 %s302, %s300
      %s304 = smul.addr %s303, 8
      %s305 = scalar_lea.vmem %s6, %s304
      %v306 = vld [vmem:[%s291] sm:$0xff]
      %v307 = vld [vmem:[%s1] sm:$0x1]
      %v309 = vperm.slane %v307, 0
      %v311 = vmul.f32 %v306, %v309
      %v312 = vld [vmem:[%s2] sm:$0x1]
      %v314 = vperm.slane %v312, 0
      %v316 = vadd.f32 %v311, %v314
      %v317 = vld [vmem:[%s298] sm:$0xff]
      %v318 = vld [vmem:[%s4] sm:$0x1]
      %v320 = vperm.slane %v318, 0
      %v322 = vmul.f32 %v317, %v320
      %v323 = vld [vmem:[%s5] sm:$0x1]
      %v325 = vperm.slane %v323, 0
      %v327 = vadd.f32 %v322, %v325
      %v328 = vadd.f32 %v316, %v327
      %v329 = vmax.f32 %v328, 0.0
      %vm330 = vcmask 523264
      %331 = vst.msk [vmem:[%s305] sm:$0xff] %vm330, %v329
      %p332 = scmp.lt.s32.totalorder %s21, 1
      %s333 = scalar_select %p332, %s21, 1
      %p334 = scmp.lt.s32.totalorder %s22, 0
      %s335 = scalar_select %p334, %s22, 0
      %s336 = sadd.s32 %s335, %s333
      %s337 = smul.addr %s336, 8
      %s338 = scalar_lea.vmem %s6, %s337
      // Predicated region
      $region45: #{basic_block_forward.5} parent=43 // pred_check
        %p339 = pneg %p189
      $region46: #{basic_block_forward.5} parent=43 // pred_check_branch
        %341 = sbr.rel (%p339) target = $region48
      $region47: #{basic_block_forward.5} parent=43 // pred_region
        _
      $region48: #{basic_block_forward.5} parent=43 // pred_fallthru
        _
    $region44: #{basic_block_forward.5} parent=5 // pred_fallthru
      _
    %p342 = scmp.le.s32.totalorder 2, %s12
    // Predicated region
    $region49: #{basic_block_forward.5} parent=5 // pred_check
      %p343 = pneg %p342
    $region50: #{basic_block_forward.5} parent=5 // pred_check_branch
      %345 = sbr.rel (%p343) target = $region52
    $region51: #{basic_block_forward.5} parent=5 // pred_region
      %s346 = ssub.s32 %s12, 2
      // Predicated region
      $region53: #{basic_block_forward.5} parent=51 // pred_check
        %p347 = pneg %p195
      $region54: #{basic_block_forward.5} parent=51 // pred_check_branch
        %349 = sbr.rel (%p347) target = $region56
      $region55: #{basic_block_forward.5} parent=51 // pred_region
        %p350 = scmp.lt.s32.totalorder %s23, 1
        %s351 = scalar_select %p350, %s23, 1
        %p352 = scmp.lt.s32.totalorder %s24, 0
        %s353 = scalar_select %p352, %s24, 0
        %s354 = sadd.s32 %s353, %s351
        %s355 = smul.addr %s354, 8
        %s356 = scalar_lea.vmem %s6, %s355
      $region56: #{basic_block_forward.5} parent=51 // pred_fallthru
        _
    $region52: #{basic_block_forward.5} parent=5 // pred_fallthru
      _
  $region6: #{basic_block_forward.5} parent=0 // loop_footer
    %s16 = sadd.s32 1, %s12
  $region7: #{basic_block_forward.5} parent=0 // loop_footer_branch
    %11 = sbr.rel target = $region3
  $region8: #{basic_block_forward.5} parent=0 // loop_exit
    _

// kernel: basic_block_forward.4
$region0: #{basic_block_forward.4}
  #allocation0 [shape = 'u32[]', space=smem, size = 0x4, offset = 0x4, fixed_abs, tag = 'smem constant byte address 0x4 - core index']
  #allocation1 [shape = 'u32[72,128]{1,0:T(1,128)}', space=vmem, size = 0x9000, scoped, tag = 'internal scratch']
  %s0 = inlined_call_operand.vmem [shape: f32[2,8,8,8], index: 0, kind: input, shape index: {}]
  %s1 = inlined_call_operand.vmem [shape: f32[1,8], index: 1, kind: input, shape index: {}]
  %s2 = inlined_call_operand.vmem [shape: f32[1,8], index: 2, kind: input, shape index: {}]
  %s3 = inlined_call_operand.vmem [shape: bf16[72,8], index: 3, kind: input, shape index: {}]
  %s4 = inlined_call_operand.vmem [shape: f32[2,8,8,8], index: 4, kind: output, shape index: {0}]
  %s5 = inlined_call_operand.vmem [shape: f32[2,1,2,8], index: 5, kind: output, shape index: {1}]
  %6 = xla_tuple %s4, %s5
  %s7 = sld [smem:[#allocation0]]
  $region57: #{basic_block_forward.4} parent=0
    _
  %s9 = ssub.s32 1, %s7
  %s10 = scalar_select 0, %s9, %s7
  loop: start=0, step=1, limit=4
  $region2: #{basic_block_forward.4} parent=0 // loop_pre_header
    _
  $region3: #{basic_block_forward.4} parent=0 // loop_header
    %s12 = sphi 0, %s16
    %p13 = scmp.ge.s32.totalorder %s12, 4
    %s19 = sphi 0, %s31
    %s20 = sphi 0, %s27
    %s21 = sphi 0, %s19
    %s22 = sphi 0, %s20
    %s23 = sphi 0, %s21
    %s24 = sphi 0, %s22
    %s34 = sphi 0, %s36
    %s37 = sphi 0, %s34
    %s38 = sphi 0, %s37
    %s54 = sphi 0, %s38
    %s58 = sphi 0, %s58
    %s60 = sphi 0, %s58
    %s61 = sphi 0, %s60
    %s75 = sphi 0, %s61
    %s79 = sphi 0, %s79
    %s81 = sphi 0, %s79
    %s82 = sphi 0, %s81
    %s96 = sphi 0, %s82
    %s100 = sphi 0, %s100
    %s102 = sphi 0, %s100
    %s103 = sphi 0, %s102
    %s117 = sphi 0, %s103
    %s125 = sphi 0, %s127
    %s128 = sphi 0, %s125
    %s129 = sphi 0, %s128
    %s145 = sphi 0, %s129
    %s153 = sphi 0, %s155
    %s156 = sphi 0, %s153
    %s157 = sphi 0, %s156
    %s173 = sphi 0, %s157
  $region4: #{basic_block_forward.4} parent=0 // loop_header_branch
    %15 = sbr.rel (%p13) target = $region8
  $region5: #{basic_block_forward.4} parent=0 // loop_body
    %s17 = ssub.s32 %s12, 1
    %s18 = ssub.s32 %s12, 2
    %s25 = sadd.s32 1, %s20
    %p26 = scmp.ge.s32.totalorder %s25, 1
    %s27 = scalar_select %p26, 0, %s25
    %s28 = sadd.s32 1, %s19
    %s29 = scalar_select %p26, %s28, %s19
    %p30 = scmp.ge.s32.totalorder %s29, 2
    %s31 = scalar_select %p30, 0, %s29
    %s32 = ssub.s32 %s19, %s31
    %p33 = scmp.eq.s32.totalorder %s32, 0
    %s35 = sadd.s32 %s34, 1
    %s36 = scalar_select %p33, %s34, %s35
    %p39 = pneg %p33
    %p40 = scmp.eq.s32.totalorder %s12, 1
    %p41 = por %p39, %p40
    %p42 = scmp.ne.s32.totalorder %s34, %s37
    %p43 = scmp.eq.s32.totalorder %s12, 0
    %p44 = por %p42, %p43
    %p45 = scmp.ne.s32.totalorder %s34, %s37
    %p46 = scmp.eq.s32.totalorder %s17, 1
    %p47 = por %p45, %p46
    %p48 = scmp.ne.s32.totalorder %s37, %s38
    %p49 = scmp.eq.s32.totalorder %s17, 0
    %p50 = por %p48, %p49
    %p51 = scmp.ne.s32.totalorder %s37, %s38
    %p52 = scmp.eq.s32.totalorder %s18, 1
    %p53 = por %p51, %p52
    %p55 = scmp.ne.s32.totalorder %s38, %s54
    %p56 = scmp.eq.s32.totalorder %s18, 0
    %p57 = por %p55, %p56
    %s59 = sadd.s32 %s58, 1
    %p62 = scmp.eq.s32.totalorder %s12, 1
    %p63 = scmp.ne.s32.totalorder %s58, %s60
    %p64 = scmp.eq.s32.totalorder %s12, 0
    %p65 = por %p63, %p64
    %p66 = scmp.ne.s32.totalorder %s58, %s60
    %p67 = scmp.eq.s32.totalorder %s17, 1
    %p68 = por %p66, %p67
    %p69 = scmp.ne.s32.totalorder %s60, %s61
    %p70 = scmp.eq.s32.totalorder %s17, 0
    %p71 = por %p69, %p70
    %p72 = scmp.ne.s32.totalorder %s60, %s61
    %p73 = scmp.eq.s32.totalorder %s18, 1
    %p74 = por %p72, %p73
    %p76 = scmp.ne.s32.totalorder %s61, %s75
    %p77 = scmp.eq.s32.totalorder %s18, 0
    %p78 = por %p76, %p77
    %s80 = sadd.s32 %s79, 1
    %p83 = scmp.eq.s32.totalorder %s12, 1
    %p84 = scmp.ne.s32.totalorder %s79, %s81
    %p85 = scmp.eq.s32.totalorder %s12, 0
    %p86 = por %p84, %p85
    %p87 = scmp.ne.s32.totalorder %s79, %s81
    %p88 = scmp.eq.s32.totalorder %s17, 1
    %p89 = por %p87, %p88
    %p90 = scmp.ne.s32.totalorder %s81, %s82
    %p91 = scmp.eq.s32.totalorder %s17, 0
    %p92 = por %p90, %p91
    %p93 = scmp.ne.s32.totalorder %s81, %s82
    %p94 = scmp.eq.s32.totalorder %s18, 1
    %p95 = por %p93, %p94
    %p97 = scmp.ne.s32.totalorder %s82, %s96
    %p98 = scmp.eq.s32.totalorder %s18, 0
    %p99 = por %p97, %p98
    %s101 = sadd.s32 %s100, 1
    %p104 = scmp.eq.s32.totalorder %s12, 1
    %p105 = scmp.ne.s32.totalorder %s100, %s102
    %p106 = scmp.eq.s32.totalorder %s12, 0
    %p107 = por %p105, %p106
    %p108 = scmp.ne.s32.totalorder %s100, %s102
    %p109 = scmp.eq.s32.totalorder %s17, 1
    %p110 = por %p108, %p109
    %p111 = scmp.ne.s32.totalorder %s102, %s103
    %p112 = scmp.eq.s32.totalorder %s17, 0
    %p113 = por %p111, %p112
    %p114 = scmp.ne.s32.totalorder %s102, %s103
    %p115 = scmp.eq.s32.totalorder %s18, 1
    %p116 = por %p114, %p115
    %p118 = scmp.ne.s32.totalorder %s103, %s117
    %p119 = scmp.eq.s32.totalorder %s18, 0
    %p120 = por %p118, %p119
    %s121 = ssub.s32 %s19, %s31
    %s122 = ssub.s32 %s20, %s27
    %s123 = sor.u32 %s121, %s122
    %p124 = scmp.eq.s32.totalorder %s123, 0
    %s126 = sadd.s32 %s125, 1
    %s127 = scalar_select %p124, %s125, %s126
    %p130 = pneg %p124
    %p131 = scmp.eq.s32.totalorder %s12, 1
    %p132 = por %p130, %p131
    %p133 = scmp.ne.s32.totalorder %s125, %s128
    %p134 = scmp.eq.s32.totalorder %s12, 0
    %p135 = por %p133, %p134
    %p136 = scmp.ne.s32.totalorder %s125, %s128
    %p137 = scmp.eq.s32.totalorder %s17, 1
    %p138 = por %p136, %p137
    %p139 = scmp.ne.s32.totalorder %s128, %s129
    %p140 = scmp.eq.s32.totalorder %s17, 0
    %p141 = por %p139, %p140
    %p142 = scmp.ne.s32.totalorder %s128, %s129
    %p143 = scmp.eq.s32.totalorder %s18, 1
    %p144 = por %p142, %p143
    %p146 = scmp.ne.s32.totalorder %s129, %s145
    %p147 = scmp.eq.s32.totalorder %s18, 0
    %p148 = por %p146, %p147
    %s149 = ssub.s32 %s19, %s31
    %s150 = ssub.s32 %s20, %s27
    %s151 = sor.u32 %s149, %s150
    %p152 = scmp.eq.s32.totalorder %s151, 0
    %s154 = sadd.s32 %s153, 1
    %s155 = scalar_select %p152, %s153, %s154
    %p158 = pneg %p152
    %p159 = scmp.eq.s32.totalorder %s12, 1
    %p160 = por %p158, %p159
    %p161 = scmp.ne.s32.totalorder %s153, %s156
    %p162 = scmp.eq.s32.totalorder %s12, 0
    %p163 = por %p161, %p162
    %p164 = scmp.ne.s32.totalorder %s153, %s156
    %p165 = scmp.eq.s32.totalorder %s17, 1
    %p166 = por %p164, %p165
    %p167 = scmp.ne.s32.totalorder %s156, %s157
    %p168 = scmp.eq.s32.totalorder %s17, 0
    %p169 = por %p167, %p168
    %p170 = scmp.ne.s32.totalorder %s156, %s157
    %p171 = scmp.eq.s32.totalorder %s18, 1
    %p172 = por %p170, %p171
    %p174 = scmp.ne.s32.totalorder %s157, %s173
    %p175 = scmp.eq.s32.totalorder %s18, 0
    %p176 = por %p174, %p175
    %p177 = scmp.le.s32.totalorder 1, %s12
    %p178 = scmp.lt.s32.totalorder %s12, 3
    %p179 = pnand %p177, %p178
    %p180 = pneg %p179
    // Predicated region
    $region9: #{basic_block_forward.4} parent=5 // pred_check
      _
    $region10: #{basic_block_forward.4} parent=5 // pred_check_branch
      %182 = sbr.rel (%p179) target = $region12
    $region11: #{basic_block_forward.4} parent=5 // pred_region
      %s183 = ssub.s32 %s12, 1
      // Predicated region
      $region13: #{basic_block_forward.4} parent=11 // pred_check
        %p184 = pneg %p71
      $region14: #{basic_block_forward.4} parent=11 // pred_check_branch
        %186 = sbr.rel (%p184) target = $region16
      $region15: #{basic_block_forward.4} parent=11 // pred_region
        _
      $region16: #{basic_block_forward.4} parent=11 // pred_fallthru
        _
      // Predicated region
      $region17: #{basic_block_forward.4} parent=11 // pred_check
        %p187 = pneg %p92
      $region18: #{basic_block_forward.4} parent=11 // pred_check_branch
        %189 = sbr.rel (%p187) target = $region20
      $region19: #{basic_block_forward.4} parent=11 // pred_region
        _
      $region20: #{basic_block_forward.4} parent=11 // pred_fallthru
        _
      // Predicated region
      $region21: #{basic_block_forward.4} parent=11 // pred_check
        %p190 = pneg %p113
      $region22: #{basic_block_forward.4} parent=11 // pred_check_branch
        %192 = sbr.rel (%p190) target = $region24
      $region23: #{basic_block_forward.4} parent=11 // pred_region
        _
      $region24: #{basic_block_forward.4} parent=11 // pred_fallthru
        _
    $region12: #{basic_block_forward.4} parent=5 // pred_fallthru
      _
    %p193 = scmp.lt.s32.totalorder %s12, 2
    // Predicated region
    $region25: #{basic_block_forward.4} parent=5 // pred_check
      %p194 = pneg %p193
    $region26: #{basic_block_forward.4} parent=5 // pred_check_branch
      %196 = sbr.rel (%p194) target = $region28
    $region27: #{basic_block_forward.4} parent=5 // pred_region
      // Predicated region
      $region29: #{basic_block_forward.4} parent=27 // pred_check
        %p197 = pneg %p44
      $region30: #{basic_block_forward.4} parent=27 // pred_check_branch
        %199 = sbr.rel (%p197) target = $region32
      $region31: #{basic_block_forward.4} parent=27 // pred_region
        %p200 = scmp.lt.s32.totalorder %s19, 1
        %s201 = scalar_select %p200, %s19, 1
        %s202 = smul.addr %s201, 8
        %s203 = smul.addr %s202, 8
        %s204 = scalar_lea.vmem %s0, %s203
      $region32: #{basic_block_forward.4} parent=27 // pred_fallthru
        _
    $region28: #{basic_block_forward.4} parent=5 // pred_fallthru
      _
    %p205 = scmp.le.s32.totalorder 1, %s12
    %p206 = scmp.lt.s32.totalorder %s12, 3
    %p207 = pnand %p205, %p206
    %p208 = pneg %p207
    // Predicated region
    $region33: #{basic_block_forward.4} parent=5 // pred_check
      _
    $region34: #{basic_block_forward.4} parent=5 // pred_check_branch
      %210 = sbr.rel (%p207) target = $region36
    $region35: #{basic_block_forward.4} parent=5 // pred_region
      %s211 = ssub.s32 %s12, 1
      %p212 = scmp.lt.s32.totalorder %s21, 1
      %s213 = scalar_select %p212, %s21, 1
      %s214 = smul.addr %s213, 8
      %s215 = smul.addr %s214, 8
      %s216 = scalar_lea.vmem %s0, %s215
      %p217 = pneg %p50
      %p218 = pneg %p47
      %p219 = pneg %p71
      %p220 = pneg %p68
      %p221 = pneg %p92
      %p222 = pneg %p89
      %p223 = pneg %p113
      %p224 = pneg %p110
      %p225 = pneg %p141
      %p226 = pneg %p138
      %s227 = smul.u32 8, %s22
      %p228 = scmp.lt.s32.totalorder %s21, 1
      %s229 = scalar_select %p228, %s21, 1
      %p230 = scmp.lt.s32.totalorder %s227, 7
      %s231 = scalar_select %p230, %s227, 7
      %s232 = smul.addr %s229, 8
      %s233 = sadd.s32 %s231, %s232
      %s234 = smul.addr %s233, 8
      %s235 = scalar_lea.vmem %s4, %s234
      %p236 = pneg %p169
      %p237 = pneg %p166
      %p238 = scmp.lt.s32.totalorder %s21, 1
      %s239 = scalar_select %p238, %s21, 1
      %p240 = scmp.lt.s32.totalorder %s22, 0
      %s241 = scalar_select %p240, %s22, 0
      %s242 = sadd.s32 %s241, %s239
      %s243 = smul.addr %s242, 2
      %s244 = scalar_lea.vmem %s5, %s243
      %p245 = scmp.lt.s32.totalorder %s21, 1
      %s246 = scalar_select %p245, %s21, 1
      %s247 = smul.addr %s246, 8
      %s248 = smul.addr %s247, 8
      %s249 = scalar_lea.vmem %s0, %s248
      %s250 = smul.u32 8, %s22
      %p251 = scmp.lt.s32.totalorder %s21, 1
      %s252 = scalar_select %p251, %s21, 1
      %p253 = scmp.lt.s32.totalorder %s250, 7
      %s254 = scalar_select %p253, %s250, 7
      %s255 = smul.addr %s252, 8
      %s256 = sadd.s32 %s254, %s255
      %s257 = smul.addr %s256, 8
      %s258 = scalar_lea.vmem %s4, %s257
      %s259 = smul.u32 8, %s22
      %p260 = scmp.lt.s32.totalorder %s21, 1
      %s261 = scalar_select %p260, %s21, 1
      %p262 = scmp.lt.s32.totalorder %s22, 0
      %s263 = scalar_select %p262, %s22, 0
      %s264 = sadd.s32 %s263, %s261
      %s265 = smul.addr %s264, 2
      %s266 = scalar_lea.vmem %s5, %s265
      %v268 = vld [vmem:[%s1] sm:$0x1]
      %v269 = vld [vmem:[%s2] sm:$0x1]
      %v270 = vld [vmem:[%s249] sm:$0xff]
      %v271 = vld [vmem:[%s249 + $0x8] sm:$0xff]
      %v272 = vld [vmem:[%s249 + $0x10] sm:$0xff]
      %v273 = vld [vmem:[%s249 + $0x18] sm:$0xff]
      %v274 = vld [vmem:[%s249 + $0x20] sm:$0xff]
      %v275 = vld [vmem:[%s249 + $0x28] sm:$0xff]
      %v276 = vld [vmem:[%s249 + $0x30] sm:$0xff]
      %v277 = vld [vmem:[%s249 + $0x38] sm:$0xff]
      %v279 = vperm.slane %v268, 0
      %v281 = vmul.f32 %v270, %v279
      %v282 = vmul.f32 %v271, %v279
      %v283 = vmul.f32 %v272, %v279
      %v284 = vmul.f32 %v273, %v279
      %v285 = vmul.f32 %v274, %v279
      %v286 = vmul.f32 %v275, %v279
      %v287 = vmul.f32 %v276, %v279
      %v288 = vmul.f32 %v277, %v279
      %v290 = vperm.slane %v269, 0
      %v292 = vadd.f32 %v281, %v290
      %v293 = vadd.f32 %v282, %v290
      %v294 = vadd.f32 %v283, %v290
      %v295 = vadd.f32 %v284, %v290
      %v296 = vadd.f32 %v285, %v290
      %v297 = vadd.f32 %v286, %v290
      %v298 = vadd.f32 %v287, %v290
      %v299 = vadd.f32 %v288, %v290
      %v300 = vmax.f32 %v292, 0.0
      %v301 = vmax.f32 %v293, 0.0
      %v302 = vmax.f32 %v294, 0.0
      %v303 = vmax.f32 %v295, 0.0
      %v304 = vmax.f32 %v296, 0.0
      %v305 = vmax.f32 %v297, 0.0
      %v306 = vmax.f32 %v298, 0.0
      %v307 = vmax.f32 %v299, 0.0
      %v317 = vrot.slane 0.0, 7
      %v318 = vrot.slane %v300, 7
      %v319 = vrot.slane %v301, 7
      %v320 = vrot.slane %v302, 7
      %v321 = vrot.slane %v303, 7
      %v322 = vrot.slane %v304, 7
      %v323 = vrot.slane %v305, 7
      %v324 = vrot.slane %v306, 7
      %v325 = vrot.slane %v307, 7
      %vm335 = vcmask 1040384
      %v336 = vsel %vm335, 0.0, %v317
      %v337 = vsel %vm335, 0.0, %v318
      %v338 = vsel %vm335, 0.0, %v319
      %v339 = vsel %vm335, 0.0, %v320
      %v340 = vsel %vm335, 0.0, %v321
      %v341 = vsel %vm335, 0.0, %v322
      %v342 = vsel %vm335, 0.0, %v323
      %v343 = vsel %vm335, 0.0, %v324
      %v344 = vsel %vm335, 0.0, %v325
      %v345 = vrot.slane 0.0, 1
      %v346 = vrot.slane %v300, 1
      %v347 = vrot.slane %v301, 1
      %v348 = vrot.slane %v302, 1
      %v349 = vrot.slane %v303, 1
      %v350 = vrot.slane %v304, 1
      %v351 = vrot.slane %v305, 1
      %v352 = vrot.slane %v306, 1
      %v353 = vrot.slane %v307, 1
      %vm363 = vcmask 1046528
      %v364 = vsel %vm363, %v345, 0.0
      %v365 = vsel %vm363, %v346, 0.0
      %v366 = vsel %vm363, %v347, 0.0
      %v367 = vsel %vm363, %v348, 0.0
      %v368 = vsel %vm363, %v349, 0.0
      %v369 = vsel %vm363, %v350, 0.0
      %v370 = vsel %vm363, %v351, 0.0
      %v371 = vsel %vm363, %v352, 0.0
      %v372 = vsel %vm363, %v353, 0.0
      %373 = vrot.lane.b32.xlu0 0.0, 8
      %v374 = vpop.permute.xlu0 %373
      %375 = vrot.lane.b32.xlu0 %v300, 8
      %v376 = vpop.permute.xlu0 %375
      %377 = vrot.lane.b32.xlu0 %v301, 8
      %v378 = vpop.permute.xlu0 %377
      %379 = vrot.lane.b32.xlu0 %v302, 8
      %v380 = vpop.permute.xlu0 %379
      %381 = vrot.lane.b32.xlu0 %v303, 8
      %v382 = vpop.permute.xlu0 %381
      %383 = vrot.lane.b32.xlu0 %v304, 8
      %v384 = vpop.permute.xlu0 %383
      %385 = vrot.lane.b32.xlu0 %v305, 8
      %v386 = vpop.permute.xlu0 %385
      %387 = vrot.lane.b32.xlu0 %v306, 8
      %v388 = vpop.permute.xlu0 %387
      %405 = vrot.lane.b32.xlu0 %v364, 16
      %v406 = vpop.permute.xlu0 %405
      %407 = vrot.lane.b32.xlu0 %v365, 16
      %v408 = vpop.permute.xlu0 %407
      %409 = vrot.lane.b32.xlu0 %v366, 16
      %v410 = vpop.permute.xlu0 %409
      %411 = vrot.lane.b32.xlu0 %v367, 16
      %v412 = vpop.permute.xlu0 %411
      %413 = vrot.lane.b32.xlu0 %v368, 16
      %v414 = vpop.permute.xlu0 %413
      %415 = vrot.lane.b32.xlu0 %v369, 16
      %v416 = vpop.permute.xlu0 %415
      %417 = vrot.lane.b32.xlu0 %v370, 16
      %v418 = vpop.permute.xlu0 %417
      %419 = vrot.lane.b32.xlu0 %v371, 16
      %v420 = vpop.permute.xlu0 %419
      %437 = vrot.lane.b32.xlu0 %v337, 24
      %v438 = vpop.permute.xlu0 %437
      %439 = vrot.lane.b32.xlu0 %v338, 24
      %v440 = vpop.permute.xlu0 %439
      %441 = vrot.lane.b32.xlu0 %v339, 24
      %v442 = vpop.permute.xlu0 %441
      %443 = vrot.lane.b32.xlu0 %v340, 24
      %v444 = vpop.permute.xlu0 %443
      %445 = vrot.lane.b32.xlu0 %v341, 24
      %v446 = vpop.permute.xlu0 %445
      %447 = vrot.lane.b32.xlu0 %v342, 24
      %v448 = vpop.permute.xlu0 %447
      %449 = vrot.lane.b32.xlu0 %v343, 24
      %v450 = vpop.permute.xlu0 %449
      %451 = vrot.lane.b32.xlu0 %v344, 24
      %v452 = vpop.permute.xlu0 %451
      %461 = vrot.lane.b32.xlu0 %v300, 32
      %v462 = vpop.permute.xlu0 %461
      %463 = vrot.lane.b32.xlu0 %v301, 32
      %v464 = vpop.permute.xlu0 %463
      %465 = vrot.lane.b32.xlu0 %v302, 32
      %v466 = vpop.permute.xlu0 %465
      %467 = vrot.lane.b32.xlu0 %v303, 32
      %v468 = vpop.permute.xlu0 %467
      %469 = vrot.lane.b32.xlu0 %v304, 32
      %v470 = vpop.permute.xlu0 %469
      %471 = vrot.lane.b32.xlu0 %v305, 32
      %v472 = vpop.permute.xlu0 %471
      %473 = vrot.lane.b32.xlu0 %v306, 32
      %v474 = vpop.permute.xlu0 %473
      %475 = vrot.lane.b32.xlu0 %v307, 32
      %v476 = vpop.permute.xlu0 %475
      %486 = vrot.lane.b32.xlu0 %v365, 40
      %v487 = vpop.permute.xlu0 %486
      %488 = vrot.lane.b32.xlu0 %v366, 40
      %v489 = vpop.permute.xlu0 %488
      %490 = vrot.lane.b32.xlu0 %v367, 40
      %v491 = vpop.permute.xlu0 %490
      %492 = vrot.lane.b32.xlu0 %v368, 40
      %v493 = vpop.permute.xlu0 %492
      %494 = vrot.lane.b32.xlu0 %v369, 40
      %v495 = vpop.permute.xlu0 %494
      %496 = vrot.lane.b32.xlu0 %v370, 40
      %v497 = vpop.permute.xlu0 %496
      %498 = vrot.lane.b32.xlu0 %v371, 40
      %v499 = vpop.permute.xlu0 %498
      %500 = vrot.lane.b32.xlu0 %v372, 40
      %v501 = vpop.permute.xlu0 %500
      %511 = vrot.lane.b32.xlu0 %v338, 48
      %v512 = vpop.permute.xlu0 %511
      %513 = vrot.lane.b32.xlu0 %v339, 48
      %v514 = vpop.permute.xlu0 %513
      %515 = vrot.lane.b32.xlu0 %v340, 48
      %v516 = vpop.permute.xlu0 %515
      %517 = vrot.lane.b32.xlu0 %v341, 48
      %v518 = vpop.permute.xlu0 %517
      %519 = vrot.lane.b32.xlu0 %v342, 48
      %v520 = vpop.permute.xlu0 %519
      %521 = vrot.lane.b32.xlu0 %v343, 48
      %v522 = vpop.permute.xlu0 %521
      %523 = vrot.lane.b32.xlu0 %v344, 48
      %v524 = vpop.permute.xlu0 %523
      %525 = vrot.lane.b32.xlu0 %v336, 48
      %v526 = vpop.permute.xlu0 %525
      %535 = vrot.lane.b32.xlu0 %v301, 56
      %v536 = vpop.permute.xlu0 %535
      %537 = vrot.lane.b32.xlu0 %v302, 56
      %v538 = vpop.permute.xlu0 %537
      %539 = vrot.lane.b32.xlu0 %v303, 56
      %v540 = vpop.permute.xlu0 %539
      %541 = vrot.lane.b32.xlu0 %v304, 56
      %v542 = vpop.permute.xlu0 %541
      %543 = vrot.lane.b32.xlu0 %v305, 56
      %v544 = vpop.permute.xlu0 %543
      %545 = vrot.lane.b32.xlu0 %v306, 56
      %v546 = vpop.permute.xlu0 %545
      %547 = vrot.lane.b32.xlu0 %v307, 56
      %v548 = vpop.permute.xlu0 %547
      %549 = vrot.lane.b32.xlu0 0.0, 56
      %v550 = vpop.permute.xlu0 %549
      %559 = vrot.lane.b32.xlu0 %v366, 64
      %v560 = vpop.permute.xlu0 %559
      %561 = vrot.lane.b32.xlu0 %v367, 64
      %v562 = vpop.permute.xlu0 %561
      %563 = vrot.lane.b32.xlu0 %v368, 64
      %v564 = vpop.permute.xlu0 %563
      %565 = vrot.lane.b32.xlu0 %v369, 64
      %v566 = vpop.permute.xlu0 %565
      %567 = vrot.lane.b32.xlu0 %v370, 64
      %v568 = vpop.permute.xlu0 %567
      %569 = vrot.lane.b32.xlu0 %v371, 64
      %v570 = vpop.permute.xlu0 %569
      %571 = vrot.lane.b32.xlu0 %v372, 64
      %v572 = vpop.permute.xlu0 %571
      %573 = vrot.lane.b32.xlu0 %v364, 64
      %v574 = vpop.permute.xlu0 %573
      %vm583 = vcmask 64512
      %v584 = vsel %vm583, %v336, %v374
      %v585 = vsel %vm583, %v337, %v376
      %v586 = vsel %vm583, %v338, %v378
      %v587 = vsel %vm583, %v339, %v380
      %v588 = vsel %vm583, %v340, %v382
      %v589 = vsel %vm583, %v341, %v384
      %v590 = vsel %vm583, %v342, %v386
      %v591 = vsel %vm583, %v343, %v388
      %vm592 = vcmask 130048
      %v593 = vsel %vm592, %v584, %v406
      %v594 = vsel %vm592, %v585, %v408
      %v595 = vsel %vm592, %v586, %v410
      %v596 = vsel %vm592, %v587, %v412
      %v597 = vsel %vm592, %v588, %v414
      %v598 = vsel %vm592, %v589, %v416
      %v599 = vsel %vm592, %v590, %v418
      %v600 = vsel %vm592, %v591, %v420
      %vm601 = vcmask 195584
      %v602 = vsel %vm601, %v593, %v438
      %v603 = vsel %vm601, %v594, %v440
      %v604 = vsel %vm601, %v595, %v442
      %v605 = vsel %vm601, %v596, %v444
      %v606 = vsel %vm601, %v597, %v446
      %v607 = vsel %vm601, %v598, %v448
      %v608 = vsel %vm601, %v599, %v450
      %v609 = vsel %vm601, %v600, %v452
      %vm610 = vcmask 261120
      %v611 = vsel %vm610, %v602, %v462
      %v612 = vsel %vm610, %v603, %v464
      %v613 = vsel %vm610, %v604, %v466
      %v614 = vsel %vm610, %v605, %v468
      %v615 = vsel %vm610, %v606, %v470
      %v616 = vsel %vm610, %v607, %v472
      %v617 = vsel %vm610, %v608, %v474
      %v618 = vsel %vm610, %v609, %v476
      %vm619 = vcmask 326656
      %v620 = vsel %vm619, %v611, %v487
      %v621 = vsel %vm619, %v612, %v489
      %v622 = vsel %vm619, %v613, %v491
      %v623 = vsel %vm619, %v614, %v493
      %v624 = vsel %vm619, %v615, %v495
      %v625 = vsel %vm619, %v616, %v497
      %v626 = vsel %vm619, %v617, %v499
      %v627 = vsel %vm619, %v618, %v501
      %vm628 = vcmask 392192
      %v629 = vsel %vm628, %v620, %v512
      %v630 = vsel %vm628, %v621, %v514
      %v631 = vsel %vm628, %v622, %v516
      %v632 = vsel %vm628, %v623, %v518
      %v633 = vsel %vm628, %v624, %v520
      %v634 = vsel %vm628, %v625, %v522
      %v635 = vsel %vm628, %v626, %v524
      %v636 = vsel %vm628, %v627, %v526
      %vm637 = vcmask 457728
      %v638 = vsel %vm637, %v629, %v536
      %v639 = vsel %vm637, %v630, %v538
      %v640 = vsel %vm637, %v631, %v540
      %v641 = vsel %vm637, %v632, %v542
      %v642 = vsel %vm637, %v633, %v544
      %v643 = vsel %vm637, %v634, %v546
      %v644 = vsel %vm637, %v635, %v548
      %v645 = vsel %vm637, %v636, %v550
      %vm646 = vcmask 523264
      %v647 = vsel %vm646, %v638, %v560
      %v648 = vsel %vm646, %v639, %v562
      %v649 = vsel %vm646, %v640, %v564
      %v650 = vsel %vm646, %v641, %v566
      %v651 = vsel %vm646, %v642, %v568
      %v652 = vsel %vm646, %v643, %v570
      %v653 = vsel %vm646, %v644, %v572
      %v654 = vsel %vm646, %v645, %v574
      %v655 = vpack.c.bf16 %v648, %v647
      %v656 = vpack.c.bf16 %v650, %v649
      %v657 = vpack.c.bf16 %v652, %v651
      %v658 = vpack.c.bf16 %v654, %v653
      %v659 = vld [vmem:[%s3] sm:$0xf]
      %v660 = vld [vmem:[%s3 + $0x4] sm:$0xf]
      %v661 = vld [vmem:[%s3 + $0x8] sm:$0xf]
      %v662 = vld [vmem:[%s3 + $0xc] sm:$0xf]
      %v663 = vld [vmem:[%s3 + $0x10] sm:$0xf]
      %v664 = vld [vmem:[%s3 + $0x14] sm:$0xf]
      %v665 = vld [vmem:[%s3 + $0x18] sm:$0xf]
      %v666 = vld [vmem:[%s3 + $0x1c] sm:$0xf]
      %v667 = vld [vmem:[%s3 + $0x20] sm:$0xf]
      %v677 = vunpack.c.l.b16 %v659
      %v678 = vunpack.c.l.b16 %v660
      %v679 = vunpack.c.l.b16 %v661
      %v680 = vunpack.c.l.b16 %v662
      %v681 = vunpack.c.l.b16 %v663
      %v682 = vunpack.c.l.b16 %v664
      %v683 = vunpack.c.l.b16 %v665
      %v684 = vunpack.c.l.b16 %v666
      %v685 = vunpack.c.l.b16 %v667
      %v686 = vpack.c.b16 %v678, %v677
      %v687 = vpack.c.b16 %v680, %v679
      %v688 = vpack.c.b16 %v682, %v681
      %v689 = vpack.c.b16 %v684, %v683
      %v690 = vpack.c.b16 %v685, %v685
      %vm695 = vcmask 588800
      %v697 = vsel %vm695, %v655, 0
      %v700 = vsel %vm695, %v656, 0
      %v703 = vsel %vm695, %v657, 0
      %v706 = vsel %vm695, %v658, 0
      %vm708 = vcmask 1043456
      %v710 = vsel %vm708, %v690, 0
      %712 = vmatpush.bf16.msra.mxu0 0
      %713 = vmatpush.bf16.msra.mxu0 0
      %714 = vmatpush.bf16.msra.mxu0 0
      %715 = vmatpush.bf16.msra.mxu0 %v710
      %716 = vmatpush.bf16.msra.mxu0 %v689
      %717 = vmatpush.bf16.msra.mxu0 %v688
      %718 = vmatpush.bf16.msra.mxu0 %v687
      %719 = vmatpush.bf16.msra.mxu0 %v686
      %720 = vmatmul.bf16.gmra.mxu0 %v697
      %v721 = vpop.f32.mrf.mxu0
      %v722 = vadd.f32 0.0, %v721
      %v723 = vpop.f32.mrf.mxu0
      %v724 = vadd.f32 0.0, %v723
      %725 = vmatmul.bf16.gmra.mxu0 %v700
      %v726 = vpop.f32.mrf.mxu0
      %v727 = vadd.f32 0.0, %v726
      %v728 = vpop.f32.mrf.mxu0
      %v729 = vadd.f32 0.0, %v728
      %730 = vmatmul.bf16.gmra.mxu0 %v703
      %v731 = vpop.f32.mrf.mxu0
      %v732 = vadd.f32 0.0, %v731
      %v733 = vpop.f32.mrf.mxu0
      %v734 = vadd.f32 0.0, %v733
      %735 = vmatmul.bf16.gmra.mxu0 %v706
      %v736 = vpop.f32.mrf.mxu0
      %v737 = vadd.f32 0.0, %v736
      %v738 = vpop.f32.mrf.mxu0
      %v739 = vadd.f32 0.0, %v738
      %740 = vdwg.mxu0
      %741 = vst.msk [vmem:[%s258] sm:$0xff] %vm583, %v722
      %742 = vst.msk [vmem:[%s258 + $0x8] sm:$0xff] %vm583, %v724
      %743 = vst.msk [vmem:[%s258 + $0x10] sm:$0xff] %vm583, %v727
      %744 = vst.msk [vmem:[%s258 + $0x18] sm:$0xff] %vm583, %v729
      %745 = vst.msk [vmem:[%s258 + $0x20] sm:$0xff] %vm583, %v732
      %746 = vst.msk [vmem:[%s258 + $0x28] sm:$0xff] %vm583, %v734
      %747 = vst.msk [vmem:[%s258 + $0x30] sm:$0xff] %vm583, %v737
      %748 = vst.msk [vmem:[%s258 + $0x38] sm:$0xff] %vm583, %v739
      %v749 = vsel %vm583, %v722, 0.0
      %v750 = vsel %vm583, %v724, 0.0
      %v751 = vadd.f32 %v749, %v750
      %v752 = vsel %vm583, %v727, 0.0
      %v753 = vadd.f32 %v751, %v752
      %v754 = vsel %vm583, %v729, 0.0
      %v755 = vadd.f32 %v753, %v754
      %v756 = vsel %vm583, %v732, 0.0
      %v757 = vadd.f32 %v755, %v756
      %v758 = vsel %vm583, %v734, 0.0
      %v759 = vadd.f32 %v757, %v758
      %v760 = vsel %vm583, %v737, 0.0
      %v761 = vadd.f32 %v759, %v760
      %v762 = vsel %vm583, %v739, 0.0
      %v763 = vadd.f32 %v761, %v762
      %v764 = vrot.slane %v763, 4
      %v765 = vadd.f32 %v763, %v764
      %v766 = vrot.slane %v765, 2
      %v767 = vadd.f32 %v765, %v766
      %v768 = vrot.slane %v767, 1
      %v769 = vadd.f32 %v767, %v768
      %v770 = vmul.f32 %v722, %v722
      %v771 = vmul.f32 %v724, %v724
      %v772 = vmul.f32 %v727, %v727
      %v773 = vmul.f32 %v729, %v729
      %v774 = vmul.f32 %v732, %v732
      %v775 = vmul.f32 %v734, %v734
      %v776 = vmul.f32 %v737, %v737
      %v777 = vmul.f32 %v739, %v739
      %v778 = vsel %vm583, %v770, 0.0
      %v779 = vsel %vm583, %v771, 0.0
      %v780 = vadd.f32 %v778, %v779
      %v781 = vsel %vm583, %v772, 0.0
      %v782 = vadd.f32 %v780, %v781
      %v783 = vsel %vm583, %v773, 0.0
      %v784 = vadd.f32 %v782, %v783
      %v785 = vsel %vm583, %v774, 0.0
      %v786 = vadd.f32 %v784, %v785
      %v787 = vsel %vm583, %v775, 0.0
      %v788 = vadd.f32 %v786, %v787
      %v789 = vsel %vm583, %v776, 0.0
      %v790 = vadd.f32 %v788, %v789
      %v791 = vsel %vm583, %v777, 0.0
      %v792 = vadd.f32 %v790, %v791
      %v793 = vrot.slane %v792, 4
      %v794 = vadd.f32 %v792, %v793
      %v795 = vrot.slane %v794, 2
      %v796 = vadd.f32 %v794, %v795
      %v797 = vrot.slane %v796, 1
      %v798 = vadd.f32 %v796, %v797
      %v799 = vsel %vm335, %v769, %v798
      %vm800 = vcmask 58368
      %801 = vst.msk [vmem:[%s266] sm:$0x3] %vm800, %v799
      %s802 = smul.u32 8, %s22
      %p803 = scmp.lt.s32.totalorder %s21, 1
      %s804 = scalar_select %p803, %s21, 1
      %p805 = scmp.lt.s32.totalorder %s802, 7
      %s806 = scalar_select %p805, %s802, 7
      %s807 = smul.addr %s804, 8
      %s808 = sadd.s32 %s806, %s807
      %s809 = smul.addr %s808, 8
      %s810 = scalar_lea.vmem %s4, %s809
      %p811 = scmp.lt.s32.totalorder %s21, 1
      %s812 = scalar_select %p811, %s21, 1
      %p813 = scmp.lt.s32.totalorder %s22, 0
      %s814 = scalar_select %p813, %s22, 0
      %s815 = sadd.s32 %s814, %s812
      %s816 = smul.addr %s815, 2
      %s817 = scalar_lea.vmem %s5, %s816
      // Predicated region
      $region37: #{basic_block_forward.4} parent=35 // pred_check
        %p818 = pneg %p138
      $region38: #{basic_block_forward.4} parent=35 // pred_check_branch
        %820 = sbr.rel (%p818) target = $region40
      $region39: #{basic_block_forward.4} parent=35 // pred_region
        %s821 = smul.u32 8, %s22
      $region40: #{basic_block_forward.4} parent=35 // pred_fallthru
        _
      // Predicated region
      $region41: #{basic_block_forward.4} parent=35 // pred_check
        %p822 = pneg %p166
      $region42: #{basic_block_forward.4} parent=35 // pred_check_branch
        %824 = sbr.rel (%p822) target = $region44
      $region43: #{basic_block_forward.4} parent=35 // pred_region
        _
      $region44: #{basic_block_forward.4} parent=35 // pred_fallthru
        _
    $region36: #{basic_block_forward.4} parent=5 // pred_fallthru
      _
    %p825 = scmp.le.s32.totalorder 2, %s12
    // Predicated region
    $region45: #{basic_block_forward.4} parent=5 // pred_check
      %p826 = pneg %p825
    $region46: #{basic_block_forward.4} parent=5 // pred_check_branch
      %828 = sbr.rel (%p826) target = $region48
    $region47: #{basic_block_forward.4} parent=5 // pred_region
      %s829 = ssub.s32 %s12, 2
      // Predicated region
      $region49: #{basic_block_forward.4} parent=47 // pred_check
        %p830 = pneg %p144
      $region50: #{basic_block_forward.4} parent=47 // pred_check_branch
        %832 = sbr.rel (%p830) target = $region52
      $region51: #{basic_block_forward.4} parent=47 // pred_region
        %s833 = smul.u32 8, %s24
        %p834 = scmp.lt.s32.totalorder %s23, 1
        %s835 = scalar_select %p834, %s23, 1
        %p836 = scmp.lt.s32.totalorder %s833, 7
        %s837 = scalar_select %p836, %s833, 7
        %s838 = smul.addr %s835, 8
        %s839 = sadd.s32 %s837, %s838
        %s840 = smul.addr %s839, 8
        %s841 = scalar_lea.vmem %s4, %s840
      $region52: #{basic_block_forward.4} parent=47 // pred_fallthru
        _
      // Predicated region
      $region53: #{basic_block_forward.4} parent=47 // pred_check
        %p842 = pneg %p172
      $region54: #{basic_block_forward.4} parent=47 // pred_check_branch
        %844 = sbr.rel (%p842) target = $region56
      $region55: #{basic_block_forward.4} parent=47 // pred_region
        %p845 = scmp.lt.s32.totalorder %s23, 1
        %s846 = scalar_select %p845, %s23, 1
        %p847 = scmp.lt.s32.totalorder %s24, 0
        %s848 = scalar_select %p847, %s24, 0
        %s849 = sadd.s32 %s848, %s846
        %s850 = smul.addr %s849, 2
        %s851 = scalar_lea.vmem %s5, %s850
      $region56: #{basic_block_forward.4} parent=47 // pred_fallthru
        _
    $region48: #{basic_block_forward.4} parent=5 // pred_fallthru
      _
  $region6: #{basic_block_forward.4} parent=0 // loop_footer
    %s16 = sadd.s32 1, %s12
  $region7: #{basic_block_forward.4} parent=0 // loop_footer_branch
    %11 = sbr.rel target = $region3
  $region8: #{basic_block_forward.4} parent=0 // loop_exit
    _

// kernel: basic_block_forward.3
$region0: #{basic_block_forward.3}
  #allocation0 [shape = 'u32[]', space=smem, size = 0x4, offset = 0x4, fixed_abs, tag = 'smem constant byte address 0x4 - core index']
  #allocation1 [shape = 'u32[72,128]{1,0:T(1,128)}', space=vmem, size = 0x9000, scoped, tag = 'internal scratch']
  %s0 = inlined_call_operand.vmem [shape: f32[2,18,9,8], index: 0, kind: input, shape index: {}]
  %s1 = inlined_call_operand.vmem [shape: bf16[36,8], index: 1, kind: input, shape index: {}]
  %s2 = inlined_call_operand.vmem [shape: bf16[4,8], index: 2, kind: input, shape index: {}]
  %s3 = inlined_call_operand.vmem [shape: f32[2,8,8,8], index: 3, kind: output, shape index: {0}]
  %s4 = inlined_call_operand.vmem [shape: f32[2,1,2,8], index: 4, kind: output, shape index: {1}]
  %s5 = inlined_call_operand.vmem [shape: f32[2,8,8,8], index: 5, kind: output, shape index: {2}]
  %s6 = inlined_call_operand.vmem [shape: f32[2,1,2,8], index: 6, kind: output, shape index: {3}]
  %7 = xla_tuple %s3, %s4, %s5, %s6
  %s8 = sld [smem:[#allocation0]]
  $region69: #{basic_block_forward.3} parent=0
    _
  %s10 = ssub.s32 1, %s8
  %s11 = scalar_select 0, %s10, %s8
  loop: start=0, step=1, limit=4
  $region2: #{basic_block_forward.3} parent=0 // loop_pre_header
    _
  $region3: #{basic_block_forward.3} parent=0 // loop_header
    %s13 = sphi 0, %s17
    %p14 = scmp.ge.s32.totalorder %s13, 4
    %s20 = sphi 0, %s32
    %s21 = sphi 0, %s28
    %s22 = sphi 0, %s20
    %s23 = sphi 0, %s21
    %s24 = sphi 0, %s22
    %s25 = sphi 0, %s23
    %s35 = sphi 0, %s37
    %s38 = sphi 0, %s35
    %s39 = sphi 0, %s38
    %s55 = sphi 0, %s39
    %s59 = sphi 0, %s59
    %s61 = sphi 0, %s59
    %s62 = sphi 0, %s61
    %s76 = sphi 0, %s62
    %s80 = sphi 0, %s80
    %s82 = sphi 0, %s80
    %s83 = sphi 0, %s82
    %s97 = sphi 0, %s83
    %s105 = sphi 0, %s107
    %s108 = sphi 0, %s105
    %s109 = sphi 0, %s108
    %s125 = sphi 0, %s109
    %s133 = sphi 0, %s135
    %s136 = sphi 0, %s133
    %s137 = sphi 0, %s136
    %s153 = sphi 0, %s137
    %s161 = sphi 0, %s163
    %s164 = sphi 0, %s161
    %s165 = sphi 0, %s164
    %s181 = sphi 0, %s165
    %s189 = sphi 0, %s191
    %s192 = sphi 0, %s189
    %s193 = sphi 0, %s192
    %s209 = sphi 0, %s193
  $region4: #{basic_block_forward.3} parent=0 // loop_header_branch
    %16 = sbr.rel (%p14) target = $region8
  $region5: #{basic_block_forward.3} parent=0 // loop_body
    %s18 = ssub.s32 %s13, 1
    %s19 = ssub.s32 %s13, 2
    %s26 = sadd.s32 1, %s21
    %p27 = scmp.ge.s32.totalorder %s26, 1
    %s28 = scalar_select %p27, 0, %s26
    %s29 = sadd.s32 1, %s20
    %s30 = scalar_select %p27, %s29, %s20
    %p31 = scmp.ge.s32.totalorder %s30, 2
    %s32 = scalar_select %p31, 0, %s30
    %s33 = ssub.s32 %s20, %s32
    %p34 = scmp.eq.s32.totalorder %s33, 0
    %s36 = sadd.s32 %s35, 1
    %s37 = scalar_select %p34, %s35, %s36
    %p40 = pneg %p34
    %p41 = scmp.eq.s32.totalorder %s13, 1
    %p42 = por %p40, %p41
    %p43 = scmp.ne.s32.totalorder %s35, %s38
    %p44 = scmp.eq.s32.totalorder %s13, 0
    %p45 = por %p43, %p44
    %p46 = scmp.ne.s32.totalorder %s35, %s38
    %p47 = scmp.eq.s32.totalorder %s18, 1
    %p48 = por %p46, %p47
    %p49 = scmp.ne.s32.totalorder %s38, %s39
    %p50 = scmp.eq.s32.totalorder %s18, 0
    %p51 = por %p49, %p50
    %p52 = scmp.ne.s32.totalorder %s38, %s39
    %p53 = scmp.eq.s32.totalorder %s19, 1
    %p54 = por %p52, %p53
    %p56 = scmp.ne.s32.totalorder %s39, %s55
    %p57 = scmp.eq.s32.totalorder %s19, 0
    %p58 = por %p56, %p57
    %s60 = sadd.s32 %s59, 1
    %p63 = scmp.eq.s32.totalorder %s13, 1
    %p64 = scmp.ne.s32.totalorder %s59, %s61
    %p65 = scmp.eq.s32.totalorder %s13, 0
    %p66 = por %p64, %p65
    %p67 = scmp.ne.s32.totalorder %s59, %s61
    %p68 = scmp.eq.s32.totalorder %s18, 1
    %p69 = por %p67, %p68
    %p70 = scmp.ne.s32.totalorder %s61, %s62
    %p71 = scmp.eq.s32.totalorder %s18, 0
    %p72 = por %p70, %p71
    %p73 = scmp.ne.s32.totalorder %s61, %s62
    %p74 = scmp.eq.s32.totalorder %s19, 1
    %p75 = por %p73, %p74
    %p77 = scmp.ne.s32.totalorder %s62, %s76
    %p78 = scmp.eq.s32.totalorder %s19, 0
    %p79 = por %p77, %p78
    %s81 = sadd.s32 %s80, 1
    %p84 = scmp.eq.s32.totalorder %s13, 1
    %p85 = scmp.ne.s32.totalorder %s80, %s82
    %p86 = scmp.eq.s32.totalorder %s13, 0
    %p87 = por %p85, %p86
    %p88 = scmp.ne.s32.totalorder %s80, %s82
    %p89 = scmp.eq.s32.totalorder %s18, 1
    %p90 = por %p88, %p89
    %p91 = scmp.ne.s32.totalorder %s82, %s83
    %p92 = scmp.eq.s32.totalorder %s18, 0
    %p93 = por %p91, %p92
    %p94 = scmp.ne.s32.totalorder %s82, %s83
    %p95 = scmp.eq.s32.totalorder %s19, 1
    %p96 = por %p94, %p95
    %p98 = scmp.ne.s32.totalorder %s83, %s97
    %p99 = scmp.eq.s32.totalorder %s19, 0
    %p100 = por %p98, %p99
    %s101 = ssub.s32 %s20, %s32
    %s102 = ssub.s32 %s21, %s28
    %s103 = sor.u32 %s101, %s102
    %p104 = scmp.eq.s32.totalorder %s103, 0
    %s106 = sadd.s32 %s105, 1
    %s107 = scalar_select %p104, %s105, %s106
    %p110 = pneg %p104
    %p111 = scmp.eq.s32.totalorder %s13, 1
    %p112 = por %p110, %p111
    %p113 = scmp.ne.s32.totalorder %s105, %s108
    %p114 = scmp.eq.s32.totalorder %s13, 0
    %p115 = por %p113, %p114
    %p116 = scmp.ne.s32.totalorder %s105, %s108
    %p117 = scmp.eq.s32.totalorder %s18, 1
    %p118 = por %p116, %p117
    %p119 = scmp.ne.s32.totalorder %s108, %s109
    %p120 = scmp.eq.s32.totalorder %s18, 0
    %p121 = por %p119, %p120
    %p122 = scmp.ne.s32.totalorder %s108, %s109
    %p123 = scmp.eq.s32.totalorder %s19, 1
    %p124 = por %p122, %p123
    %p126 = scmp.ne.s32.totalorder %s109, %s125
    %p127 = scmp.eq.s32.totalorder %s19, 0
    %p128 = por %p126, %p127
    %s129 = ssub.s32 %s20, %s32
    %s130 = ssub.s32 %s21, %s28
    %s131 = sor.u32 %s129, %s130
    %p132 = scmp.eq.s32.totalorder %s131, 0
    %s134 = sadd.s32 %s133, 1
    %s135 = scalar_select %p132, %s133, %s134
    %p138 = pneg %p132
    %p139 = scmp.eq.s32.totalorder %s13, 1
    %p140 = por %p138, %p139
    %p141 = scmp.ne.s32.totalorder %s133, %s136
    %p142 = scmp.eq.s32.totalorder %s13, 0
    %p143 = por %p141, %p142
    %p144 = scmp.ne.s32.totalorder %s133, %s136
    %p145 = scmp.eq.s32.totalorder %s18, 1
    %p146 = por %p144, %p145
    %p147 = scmp.ne.s32.totalorder %s136, %s137
    %p148 = scmp.eq.s32.totalorder %s18, 0
    %p149 = por %p147, %p148
    %p150 = scmp.ne.s32.totalorder %s136, %s137
    %p151 = scmp.eq.s32.totalorder %s19, 1
    %p152 = por %p150, %p151
    %p154 = scmp.ne.s32.totalorder %s137, %s153
    %p155 = scmp.eq.s32.totalorder %s19, 0
    %p156 = por %p154, %p155
    %s157 = ssub.s32 %s20, %s32
    %s158 = ssub.s32 %s21, %s28
    %s159 = sor.u32 %s157, %s158
    %p160 = scmp.eq.s32.totalorder %s159, 0
    %s162 = sadd.s32 %s161, 1
    %s163 = scalar_select %p160, %s161, %s162
    %p166 = pneg %p160
    %p167 = scmp.eq.s32.totalorder %s13, 1
    %p168 = por %p166, %p167
    %p169 = scmp.ne.s32.totalorder %s161, %s164
    %p170 = scmp.eq.s32.totalorder %s13, 0
    %p171 = por %p169, %p170
    %p172 = scmp.ne.s32.totalorder %s161, %s164
    %p173 = scmp.eq.s32.totalorder %s18, 1
    %p174 = por %p172, %p173
    %p175 = scmp.ne.s32.totalorder %s164, %s165
    %p176 = scmp.eq.s32.totalorder %s18, 0
    %p177 = por %p175, %p176
    %p178 = scmp.ne.s32.totalorder %s164, %s165
    %p179 = scmp.eq.s32.totalorder %s19, 1
    %p180 = por %p178, %p179
    %p182 = scmp.ne.s32.totalorder %s165, %s181
    %p183 = scmp.eq.s32.totalorder %s19, 0
    %p184 = por %p182, %p183
    %s185 = ssub.s32 %s20, %s32
    %s186 = ssub.s32 %s21, %s28
    %s187 = sor.u32 %s185, %s186
    %p188 = scmp.eq.s32.totalorder %s187, 0
    %s190 = sadd.s32 %s189, 1
    %s191 = scalar_select %p188, %s189, %s190
    %p194 = pneg %p188
    %p195 = scmp.eq.s32.totalorder %s13, 1
    %p196 = por %p194, %p195
    %p197 = scmp.ne.s32.totalorder %s189, %s192
    %p198 = scmp.eq.s32.totalorder %s13, 0
    %p199 = por %p197, %p198
    %p200 = scmp.ne.s32.totalorder %s189, %s192
    %p201 = scmp.eq.s32.totalorder %s18, 1
    %p202 = por %p200, %p201
    %p203 = scmp.ne.s32.totalorder %s192, %s193
    %p204 = scmp.eq.s32.totalorder %s18, 0
    %p205 = por %p203, %p204
    %p206 = scmp.ne.s32.totalorder %s192, %s193
    %p207 = scmp.eq.s32.totalorder %s19, 1
    %p208 = por %p206, %p207
    %p210 = scmp.ne.s32.totalorder %s193, %s209
    %p211 = scmp.eq.s32.totalorder %s19, 0
    %p212 = por %p210, %p211
    %p213 = scmp.le.s32.totalorder 1, %s13
    %p214 = scmp.lt.s32.totalorder %s13, 3
    %p215 = pnand %p213, %p214
    %p216 = pneg %p215
    // Predicated region
    $region9: #{basic_block_forward.3} parent=5 // pred_check
      _
    $region10: #{basic_block_forward.3} parent=5 // pred_check_branch
      %218 = sbr.rel (%p215) target = $region12
    $region11: #{basic_block_forward.3} parent=5 // pred_region
      %s219 = ssub.s32 %s13, 1
      // Predicated region
      $region13: #{basic_block_forward.3} parent=11 // pred_check
        %p220 = pneg %p72
      $region14: #{basic_block_forward.3} parent=11 // pred_check_branch
        %222 = sbr.rel (%p220) target = $region16
      $region15: #{basic_block_forward.3} parent=11 // pred_region
        _
      $region16: #{basic_block_forward.3} parent=11 // pred_fallthru
        _
      // Predicated region
      $region17: #{basic_block_forward.3} parent=11 // pred_check
        %p223 = pneg %p93
      $region18: #{basic_block_forward.3} parent=11 // pred_check_branch
        %225 = sbr.rel (%p223) target = $region20
      $region19: #{basic_block_forward.3} parent=11 // pred_region
        _
      $region20: #{basic_block_forward.3} parent=11 // pred_fallthru
        _
    $region12: #{basic_block_forward.3} parent=5 // pred_fallthru
      _
    %p226 = scmp.lt.s32.totalorder %s13, 2
    // Predicated region
    $region21: #{basic_block_forward.3} parent=5 // pred_check
      %p227 = pneg %p226
    $region22: #{basic_block_forward.3} parent=5 // pred_check_branch
      %229 = sbr.rel (%p227) target = $region24
    $region23: #{basic_block_forward.3} parent=5 // pred_region
      // Predicated region
      $region25: #{basic_block_forward.3} parent=23 // pred_check
        %p230 = pneg %p45
      $region26: #{basic_block_forward.3} parent=23 // pred_check_branch
        %232 = sbr.rel (%p230) target = $region28
      $region27: #{basic_block_forward.3} parent=23 // pred_region
        %p233 = scmp.lt.s32.totalorder %s20, 1
        %s234 = scalar_select %p233, %s20, 1
        %s235 = smul.addr %s234, 36
        %s236 = smul.addr %s235, 8
        %s237 = scalar_lea.vmem %s0, %s236
      $region28: #{basic_block_forward.3} parent=23 // pred_fallthru
        _
    $region24: #{basic_block_forward.3} parent=5 // pred_fallthru
      _
    %p238 = scmp.le.s32.totalorder 1, %s13
    %p239 = scmp.lt.s32.totalorder %s13, 3
    %p240 = pnand %p238, %p239
    %p241 = pneg %p240
    // Predicated region
    $region29: #{basic_block_forward.3} parent=5 // pred_check
      _
    $region30: #{basic_block_forward.3} parent=5 // pred_check_branch
      %243 = sbr.rel (%p240) target = $region32
    $region31: #{basic_block_forward.3} parent=5 // pred_region
      %s244 = ssub.s32 %s13, 1
      %p245 = scmp.lt.s32.totalorder %s22, 1
      %s246 = scalar_select %p245, %s22, 1
      %s247 = smul.addr %s246, 36
      %s248 = smul.addr %s247, 8
      %s249 = scalar_lea.vmem %s0, %s248
      %p250 = pneg %p51
      %p251 = pneg %p48
      %p252 = pneg %p72
      %p253 = pneg %p69
      %p254 = pneg %p93
      %p255 = pneg %p90
      %p256 = pneg %p121
      %p257 = pneg %p118
      %s258 = smul.u32 8, %s23
      %p259 = scmp.lt.s32.totalorder %s22, 1
      %s260 = scalar_select %p259, %s22, 1
      %p261 = scmp.lt.s32.totalorder %s258, 7
      %s262 = scalar_select %p261, %s258, 7
      %s263 = smul.addr %s260, 8
      %s264 = sadd.s32 %s262, %s263
      %s265 = smul.addr %s264, 8
      %s266 = scalar_lea.vmem %s3, %s265
      %p267 = pneg %p149
      %p268 = pneg %p146
      %p269 = scmp.lt.s32.totalorder %s22, 1
      %s270 = scalar_select %p269, %s22, 1
      %p271 = scmp.lt.s32.totalorder %s23, 0
      %s272 = scalar_select %p271, %s23, 0
      %s273 = sadd.s32 %s272, %s270
      %s274 = smul.addr %s273, 2
      %s275 = scalar_lea.vmem %s4, %s274
      %p276 = pneg %p177
      %p277 = pneg %p174
      %s278 = smul.u32 8, %s23
      %p279 = scmp.lt.s32.totalorder %s22, 1
      %s280 = scalar_select %p279, %s22, 1
      %p281 = scmp.lt.s32.totalorder %s278, 7
      %s282 = scalar_select %p281, %s278, 7
      %s283 = smul.addr %s280, 8
      %s284 = sadd.s32 %s282, %s283
      %s285 = smul.addr %s284, 8
      %s286 = scalar_lea.vmem %s5, %s285
      %p287 = pneg %p205
      %p288 = pneg %p202
      %p289 = scmp.lt.s32.totalorder %s22, 1
      %s290 = scalar_select %p289, %s22, 1
      %p291 = scmp.lt.s32.totalorder %s23, 0
      %s292 = scalar_select %p291, %s23, 0
      %s293 = sadd.s32 %s292, %s290
      %s294 = smul.addr %s293, 2
      %s295 = scalar_lea.vmem %s6, %s294
      %p296 = scmp.lt.s32.totalorder %s22, 1
      %s297 = scalar_select %p296, %s22, 1
      %s298 = smul.addr %s297, 36
      %s299 = smul.addr %s298, 8
      %s300 = scalar_lea.vmem %s0, %s299
      %s301 = smul.u32 8, %s23
      %p302 = scmp.lt.s32.totalorder %s22, 1
      %s303 = scalar_select %p302, %s22, 1
      %p304 = scmp.lt.s32.totalorder %s301, 7
      %s305 = scalar_select %p304, %s301, 7
      %s306 = smul.addr %s303, 8
      %s307 = sadd.s32 %s305, %s306
      %s308 = smul.addr %s307, 8
      %s309 = scalar_lea.vmem %s3, %s308
      %s310 = smul.u32 8, %s23
      %p311 = scmp.lt.s32.totalorder %s22, 1
      %s312 = scalar_select %p311, %s22, 1
      %p313 = scmp.lt.s32.totalorder %s23, 0
      %s314 = scalar_select %p313, %s23, 0
      %s315 = sadd.s32 %s314, %s312
      %s316 = smul.addr %s315, 2
      %s317 = scalar_lea.vmem %s4, %s316
      %s318 = smul.u32 8, %s23
      %p319 = scmp.lt.s32.totalorder %s22, 1
      %s320 = scalar_select %p319, %s22, 1
      %p321 = scmp.lt.s32.totalorder %s318, 7
      %s322 = scalar_select %p321, %s318, 7
      %s323 = smul.addr %s320, 8
      %s324 = sadd.s32 %s322, %s323
      %s325 = smul.addr %s324, 8
      %s326 = scalar_lea.vmem %s5, %s325
      %s327 = smul.u32 8, %s23
      %p328 = scmp.lt.s32.totalorder %s22, 1
      %s329 = scalar_select %p328, %s22, 1
      %p330 = scmp.lt.s32.totalorder %s23, 0
      %s331 = scalar_select %p330, %s23, 0
      %s332 = sadd.s32 %s331, %s329
      %s333 = smul.addr %s332, 2
      %s334 = scalar_lea.vmem %s6, %s333
      %s336 = smul.u32 %s23, 8
      %s337 = smul.u32 %s336, 2
      %s338 = smul.u32 %s337, 16
      %s339 = scalar_lea.vmem %s300, %s338
      %v340 = vld [vmem:[%s339] sm:$0xff]
      %v341 = vld [vmem:[%s339 + $0x8] sm:$0x1]
      %v342 = vld [vmem:[%s339 + $0x20] sm:$0xff]
      %v343 = vld [vmem:[%s339 + $0x28] sm:$0x1]
      %v344 = vld [vmem:[%s339 + $0x40] sm:$0xff]
      %v345 = vld [vmem:[%s339 + $0x48] sm:$0x1]
      %v346 = vld [vmem:[%s339 + $0x60] sm:$0xff]
      %v347 = vld [vmem:[%s339 + $0x68] sm:$0x1]
      %v348 = vld [vmem:[%s339 + $0x80] sm:$0xff]
      %v349 = vld [vmem:[%s339 + $0x88] sm:$0x1]
      %v350 = vld [vmem:[%s339 + $0xa0] sm:$0xff]
      %v351 = vld [vmem:[%s339 + $0xa8] sm:$0x1]
      %v352 = vld [vmem:[%s339 + $0xc0] sm:$0xff]
      %v353 = vld [vmem:[%s339 + $0xc8] sm:$0x1]
      %v354 = vld [vmem:[%s339 + $0xe0] sm:$0xff]
      %v355 = vld [vmem:[%s339 + $0xe8] sm:$0x1]
      %vm372 = vcmask 1046528
      %v373 = vrot.slane %v340, 1
      %v374 = vrot.slane %v341, 1
      %v375 = vsel %vm372, %v373, %v374
      %v376 = vrot.slane %v342, 1
      %v377 = vrot.slane %v343, 1
      %v378 = vsel %vm372, %v376, %v377
      %v379 = vrot.slane %v344, 1
      %v380 = vrot.slane %v345, 1
      %v381 = vsel %vm372, %v379, %v380
      %v382 = vrot.slane %v346, 1
      %v383 = vrot.slane %v347, 1
      %v384 = vsel %vm372, %v382, %v383
      %v385 = vrot.slane %v348, 1
      %v386 = vrot.slane %v349, 1
      %v387 = vsel %vm372, %v385, %v386
      %v388 = vrot.slane %v350, 1
      %v389 = vrot.slane %v351, 1
      %v390 = vsel %vm372, %v388, %v389
      %v391 = vrot.slane %v352, 1
      %v392 = vrot.slane %v353, 1
      %v393 = vsel %vm372, %v391, %v392
      %v394 = vrot.slane %v354, 1
      %v395 = vrot.slane %v355, 1
      %v396 = vsel %vm372, %v394, %v395
      %s397 = sadd.s32 %s337, 1
      %s398 = smul.u32 %s397, 16
      %s399 = scalar_lea.vmem %s300, %s398
      %v400 = vld [vmem:[%s399] sm:$0xff]
      %v401 = vld [vmem:[%s399 + $0x8] sm:$0x1]
      %v402 = vld [vmem:[%s399 + $0x20] sm:$0xff]
      %v403 = vld [vmem:[%s399 + $0x28] sm:$0x1]
      %v404 = vld [vmem:[%s399 + $0x40] sm:$0xff]
      %v405 = vld [vmem:[%s399 + $0x48] sm:$0x1]
      %v406 = vld [vmem:[%s399 + $0x60] sm:$0xff]
      %v407 = vld [vmem:[%s399 + $0x68] sm:$0x1]
      %v408 = vld [vmem:[%s399 + $0x80] sm:$0xff]
      %v409 = vld [vmem:[%s399 + $0x88] sm:$0x1]
      %v410 = vld [vmem:[%s399 + $0xa0] sm:$0xff]
      %v411 = vld [vmem:[%s399 + $0xa8] sm:$0x1]
      %v412 = vld [vmem:[%s399 + $0xc0] sm:$0xff]
      %v413 = vld [vmem:[%s399 + $0xc8] sm:$0x1]
      %v414 = vld [vmem:[%s399 + $0xe0] sm:$0xff]
      %v415 = vld [vmem:[%s399 + $0xe8] sm:$0x1]
      %v432 = vrot.slane %v400, 1
      %v433 = vrot.slane %v401, 1
      %v434 = vsel %vm372, %v432, %v433
      %v435 = vrot.slane %v402, 1
      %v436 = vrot.slane %v403, 1
      %v437 = vsel %vm372, %v435, %v436
      %v438 = vrot.slane %v404, 1
      %v439 = vrot.slane %v405, 1
      %v440 = vsel %vm372, %v438, %v439
      %v441 = vrot.slane %v406, 1
      %v442 = vrot.slane %v407, 1
      %v443 = vsel %vm372, %v441, %v442
      %v444 = vrot.slane %v408, 1
      %v445 = vrot.slane %v409, 1
      %v446 = vsel %vm372, %v444, %v445
      %v447 = vrot.slane %v410, 1
      %v448 = vrot.slane %v411, 1
      %v449 = vsel %vm372, %v447, %v448
      %v450 = vrot.slane %v412, 1
      %v451 = vrot.slane %v413, 1
      %v452 = vsel %vm372, %v450, %v451
      %v453 = vrot.slane %v414, 1
      %v454 = vrot.slane %v415, 1
      %v455 = vsel %vm372, %v453, %v454
      %s456 = sadd.s32 %s337, 2
      %s457 = smul.u32 %s456, 16
      %s458 = scalar_lea.vmem %s300, %s457
      %v459 = vld [vmem:[%s458] sm:$0xff]
      %v460 = vld [vmem:[%s458 + $0x8] sm:$0x1]
      %v461 = vld [vmem:[%s458 + $0x20] sm:$0xff]
      %v462 = vld [vmem:[%s458 + $0x28] sm:$0x1]
      %v463 = vld [vmem:[%s458 + $0x40] sm:$0xff]
      %v464 = vld [vmem:[%s458 + $0x48] sm:$0x1]
      %v465 = vld [vmem:[%s458 + $0x60] sm:$0xff]
      %v466 = vld [vmem:[%s458 + $0x68] sm:$0x1]
      %v467 = vld [vmem:[%s458 + $0x80] sm:$0xff]
      %v468 = vld [vmem:[%s458 + $0x88] sm:$0x1]
      %v469 = vld [vmem:[%s458 + $0xa0] sm:$0xff]
      %v470 = vld [vmem:[%s458 + $0xa8] sm:$0x1]
      %v471 = vld [vmem:[%s458 + $0xc0] sm:$0xff]
      %v472 = vld [vmem:[%s458 + $0xc8] sm:$0x1]
      %v473 = vld [vmem:[%s458 + $0xe0] sm:$0xff]
      %v474 = vld [vmem:[%s458 + $0xe8] sm:$0x1]
      %v491 = vrot.slane %v459, 1
      %v492 = vrot.slane %v460, 1
      %v493 = vsel %vm372, %v491, %v492
      %v494 = vrot.slane %v461, 1
      %v495 = vrot.slane %v462, 1
      %v496 = vsel %vm372, %v494, %v495
      %v497 = vrot.slane %v463, 1
      %v498 = vrot.slane %v464, 1
      %v499 = vsel %vm372, %v497, %v498
      %v500 = vrot.slane %v465, 1
      %v501 = vrot.slane %v466, 1
      %v502 = vsel %vm372, %v500, %v501
      %v503 = vrot.slane %v467, 1
      %v504 = vrot.slane %v468, 1
      %v505 = vsel %vm372, %v503, %v504
      %v506 = vrot.slane %v469, 1
      %v507 = vrot.slane %v470, 1
      %v508 = vsel %vm372, %v506, %v507
      %v509 = vrot.slane %v471, 1
      %v510 = vrot.slane %v472, 1
      %v511 = vsel %vm372, %v509, %v510
      %v512 = vrot.slane %v473, 1
      %v513 = vrot.slane %v474, 1
      %v514 = vsel %vm372, %v512, %v513
      %515 = vrot.lane.b32.xlu0 %v375, 8
      %v516 = vpop.permute.xlu0 %515
      %517 = vrot.lane.b32.xlu0 %v378, 8
      %v518 = vpop.permute.xlu0 %517
      %519 = vrot.lane.b32.xlu0 %v381, 8
      %v520 = vpop.permute.xlu0 %519
      %521 = vrot.lane.b32.xlu0 %v384, 8
      %v522 = vpop.permute.xlu0 %521
      %523 = vrot.lane.b32.xlu0 %v387, 8
      %v524 = vpop.permute.xlu0 %523
      %525 = vrot.lane.b32.xlu0 %v390, 8
      %v526 = vpop.permute.xlu0 %525
      %527 = vrot.lane.b32.xlu0 %v393, 8
      %v528 = vpop.permute.xlu0 %527
      %529 = vrot.lane.b32.xlu0 %v396, 8
      %v530 = vpop.permute.xlu0 %529
      %539 = vrot.lane.b32.xlu0 %v400, 12
      %v540 = vpop.permute.xlu0 %539
      %541 = vrot.lane.b32.xlu0 %v402, 12
      %v542 = vpop.permute.xlu0 %541
      %543 = vrot.lane.b32.xlu0 %v404, 12
      %v544 = vpop.permute.xlu0 %543
      %545 = vrot.lane.b32.xlu0 %v406, 12
      %v546 = vpop.permute.xlu0 %545
      %547 = vrot.lane.b32.xlu0 %v408, 12
      %v548 = vpop.permute.xlu0 %547
      %549 = vrot.lane.b32.xlu0 %v410, 12
      %v550 = vpop.permute.xlu0 %549
      %551 = vrot.lane.b32.xlu0 %v412, 12
      %v552 = vpop.permute.xlu0 %551
      %553 = vrot.lane.b32.xlu0 %v414, 12
      %v554 = vpop.permute.xlu0 %553
      %563 = vrot.lane.b32.xlu0 %v434, 20
      %v564 = vpop.permute.xlu0 %563
      %565 = vrot.lane.b32.xlu0 %v437, 20
      %v566 = vpop.permute.xlu0 %565
      %567 = vrot.lane.b32.xlu0 %v440, 20
      %v568 = vpop.permute.xlu0 %567
      %569 = vrot.lane.b32.xlu0 %v443, 20
      %v570 = vpop.permute.xlu0 %569
      %571 = vrot.lane.b32.xlu0 %v446, 20
      %v572 = vpop.permute.xlu0 %571
      %573 = vrot.lane.b32.xlu0 %v449, 20
      %v574 = vpop.permute.xlu0 %573
      %575 = vrot.lane.b32.xlu0 %v452, 20
      %v576 = vpop.permute.xlu0 %575
      %577 = vrot.lane.b32.xlu0 %v455, 20
      %v578 = vpop.permute.xlu0 %577
      %587 = vrot.lane.b32.xlu0 %v459, 24
      %v588 = vpop.permute.xlu0 %587
      %589 = vrot.lane.b32.xlu0 %v461, 24
      %v590 = vpop.permute.xlu0 %589
      %591 = vrot.lane.b32.xlu0 %v463, 24
      %v592 = vpop.permute.xlu0 %591
      %593 = vrot.lane.b32.xlu0 %v465, 24
      %v594 = vpop.permute.xlu0 %593
      %595 = vrot.lane.b32.xlu0 %v467, 24
      %v596 = vpop.permute.xlu0 %595
      %597 = vrot.lane.b32.xlu0 %v469, 24
      %v598 = vpop.permute.xlu0 %597
      %599 = vrot.lane.b32.xlu0 %v471, 24
      %v600 = vpop.permute.xlu0 %599
      %601 = vrot.lane.b32.xlu0 %v473, 24
      %v602 = vpop.permute.xlu0 %601
      %611 = vrot.lane.b32.xlu0 %v493, 32
      %v612 = vpop.permute.xlu0 %611
      %613 = vrot.lane.b32.xlu0 %v496, 32
      %v614 = vpop.permute.xlu0 %613
      %615 = vrot.lane.b32.xlu0 %v499, 32
      %v616 = vpop.permute.xlu0 %615
      %617 = vrot.lane.b32.xlu0 %v502, 32
      %v618 = vpop.permute.xlu0 %617
      %619 = vrot.lane.b32.xlu0 %v505, 32
      %v620 = vpop.permute.xlu0 %619
      %621 = vrot.lane.b32.xlu0 %v508, 32
      %v622 = vpop.permute.xlu0 %621
      %623 = vrot.lane.b32.xlu0 %v511, 32
      %v624 = vpop.permute.xlu0 %623
      %625 = vrot.lane.b32.xlu0 %v514, 32
      %v626 = vpop.permute.xlu0 %625
      %vm635 = vcmask 64512
      %v636 = vsel %vm635, %v340, %v516
      %v637 = vsel %vm635, %v342, %v518
      %v638 = vsel %vm635, %v344, %v520
      %v639 = vsel %vm635, %v346, %v522
      %v640 = vsel %vm635, %v348, %v524
      %v641 = vsel %vm635, %v350, %v526
      %v642 = vsel %vm635, %v352, %v528
      %v643 = vsel %vm635, %v354, %v530
      %vm644 = vcmask 97280
      %v645 = vsel %vm644, %v636, %v540
      %v646 = vsel %vm644, %v637, %v542
      %v647 = vsel %vm644, %v638, %v544
      %v648 = vsel %vm644, %v639, %v546
      %v649 = vsel %vm644, %v640, %v548
      %v650 = vsel %vm644, %v641, %v550
      %v651 = vsel %vm644, %v642, %v552
      %v652 = vsel %vm644, %v643, %v554
      %vm653 = vcmask 162816
      %v654 = vsel %vm653, %v645, %v564
      %v655 = vsel %vm653, %v646, %v566
      %v656 = vsel %vm653, %v647, %v568
      %v657 = vsel %vm653, %v648, %v570
      %v658 = vsel %vm653, %v649, %v572
      %v659 = vsel %vm653, %v650, %v574
      %v660 = vsel %vm653, %v651, %v576
      %v661 = vsel %vm653, %v652, %v578
      %vm662 = vcmask 195584
      %v663 = vsel %vm662, %v654, %v588
      %v664 = vsel %vm662, %v655, %v590
      %v665 = vsel %vm662, %v656, %v592
      %v666 = vsel %vm662, %v657, %v594
      %v667 = vsel %vm662, %v658, %v596
      %v668 = vsel %vm662, %v659, %v598
      %v669 = vsel %vm662, %v660, %v600
      %v670 = vsel %vm662, %v661, %v602
      %vm671 = vcmask 261120
      %v672 = vsel %vm671, %v663, %v612
      %v673 = vsel %vm671, %v664, %v614
      %v674 = vsel %vm671, %v665, %v616
      %v675 = vsel %vm671, %v666, %v618
      %v676 = vsel %vm671, %v667, %v620
      %v677 = vsel %vm671, %v668, %v622
      %v678 = vsel %vm671, %v669, %v624
      %v679 = vsel %vm671, %v670, %v626
      %v680 = vpack.c.bf16 %v673, %v672
      %v681 = vpack.c.bf16 %v675, %v674
      %v682 = vpack.c.bf16 %v677, %v676
      %v683 = vpack.c.bf16 %v679, %v678
      %v684 = vld [vmem:[%s1] sm:$0xf]
      %v685 = vld [vmem:[%s1 + $0x4] sm:$0xf]
      %v686 = vld [vmem:[%s1 + $0x8] sm:$0xf]
      %v687 = vld [vmem:[%s1 + $0xc] sm:$0xf]
      %v688 = vld [vmem:[%s1 + $0x10] sm:$0x3]
      %v694 = vunpack.c.l.b16 %v684
      %v695 = vunpack.c.l.b16 %v685
      %v696 = vunpack.c.l.b16 %v686
      %v697 = vunpack.c.l.b16 %v687
      %v698 = vunpack.c.l.b16 %v688
      %v699 = vpack.c.b16 %v695, %v694
      %v700 = vpack.c.b16 %v697, %v696
      %v701 = vpack.c.b16 %v698, %v698
      %vm704 = vcmask 293888
      %v706 = vsel %vm704, %v680, 0
      %v709 = vsel %vm704, %v681, 0
      %v712 = vsel %vm704, %v682, 0
      %v715 = vsel %vm704, %v683, 0
      %vm717 = vcmask 1041408
      %v719 = vsel %vm717, %v701, 0
      %721 = vmatpush.bf16.msra.mxu0 0
      %722 = vmatpush.bf16.msra.mxu0 0
      %723 = vmatpush.bf16.msra.mxu0 0
      %724 = vmatpush.bf16.msra.mxu0 0
      %725 = vmatpush.bf16.msra.mxu0 0
      %726 = vmatpush.bf16.msra.mxu0 %v719
      %727 = vmatpush.bf16.msra.mxu0 %v700
      %728 = vmatpush.bf16.msra.mxu0 %v699
      %729 = vmatmul.bf16.gmra.mxu0 %v706
      %v730 = vpop.f32.mrf.mxu0
      %v731 = vadd.f32 0.0, %v730
      %v732 = vpop.f32.mrf.mxu0
      %v733 = vadd.f32 0.0, %v732
      %734 = vmatmul.bf16.gmra.mxu0 %v709
      %v735 = vpop.f32.mrf.mxu0
      %v736 = vadd.f32 0.0, %v735
      %v737 = vpop.f32.mrf.mxu0
      %v738 = vadd.f32 0.0, %v737
      %739 = vmatmul.bf16.gmra.mxu0 %v712
      %v740 = vpop.f32.mrf.mxu0
      %v741 = vadd.f32 0.0, %v740
      %v742 = vpop.f32.mrf.mxu0
      %v743 = vadd.f32 0.0, %v742
      %744 = vmatmul.bf16.gmra.mxu0 %v715
      %v745 = vpop.f32.mrf.mxu0
      %v746 = vadd.f32 0.0, %v745
      %v747 = vpop.f32.mrf.mxu0
      %v748 = vadd.f32 0.0, %v747
      %749 = vdwg.mxu0
      %750 = vst.msk [vmem:[%s309] sm:$0xff] %vm635, %v731
      %751 = vst.msk [vmem:[%s309 + $0x8] sm:$0xff] %vm635, %v733
      %752 = vst.msk [vmem:[%s309 + $0x10] sm:$0xff] %vm635, %v736
      %753 = vst.msk [vmem:[%s309 + $0x18] sm:$0xff] %vm635, %v738
      %754 = vst.msk [vmem:[%s309 + $0x20] sm:$0xff] %vm635, %v741
      %755 = vst.msk [vmem:[%s309 + $0x28] sm:$0xff] %vm635, %v743
      %756 = vst.msk [vmem:[%s309 + $0x30] sm:$0xff] %vm635, %v746
      %757 = vst.msk [vmem:[%s309 + $0x38] sm:$0xff] %vm635, %v748
      %v758 = vsel %vm635, %v731, 0.0
      %v759 = vsel %vm635, %v733, 0.0
      %v760 = vadd.f32 %v758, %v759
      %v761 = vsel %vm635, %v736, 0.0
      %v762 = vadd.f32 %v760, %v761
      %v763 = vsel %vm635, %v738, 0.0
      %v764 = vadd.f32 %v762, %v763
      %v765 = vsel %vm635, %v741, 0.0
      %v766 = vadd.f32 %v764, %v765
      %v767 = vsel %vm635, %v743, 0.0
      %v768 = vadd.f32 %v766, %v767
      %v769 = vsel %vm635, %v746, 0.0
      %v770 = vadd.f32 %v768, %v769
      %v771 = vsel %vm635, %v748, 0.0
      %v772 = vadd.f32 %v770, %v771
      %v773 = vrot.slane %v772, 4
      %v774 = vadd.f32 %v772, %v773
      %v775 = vrot.slane %v774, 2
      %v776 = vadd.f32 %v774, %v775
      %v777 = vrot.slane %v776, 1
      %v778 = vadd.f32 %v776, %v777
      %v779 = vmul.f32 %v731, %v731
      %v780 = vmul.f32 %v733, %v733
      %v781 = vmul.f32 %v736, %v736
      %v782 = vmul.f32 %v738, %v738
      %v783 = vmul.f32 %v741, %v741
      %v784 = vmul.f32 %v743, %v743
      %v785 = vmul.f32 %v746, %v746
      %v786 = vmul.f32 %v748, %v748
      %v787 = vsel %vm635, %v779, 0.0
      %v788 = vsel %vm635, %v780, 0.0
      %v789 = vadd.f32 %v787, %v788
      %v790 = vsel %vm635, %v781, 0.0
      %v791 = vadd.f32 %v789, %v790
      %v792 = vsel %vm635, %v782, 0.0
      %v793 = vadd.f32 %v791, %v792
      %v794 = vsel %vm635, %v783, 0.0
      %v795 = vadd.f32 %v793, %v794
      %v796 = vsel %vm635, %v784, 0.0
      %v797 = vadd.f32 %v795, %v796
      %v798 = vsel %vm635, %v785, 0.0
      %v799 = vadd.f32 %v797, %v798
      %v800 = vsel %vm635, %v786, 0.0
      %v801 = vadd.f32 %v799, %v800
      %v802 = vrot.slane %v801, 4
      %v803 = vadd.f32 %v801, %v802
      %v804 = vrot.slane %v803, 2
      %v805 = vadd.f32 %v803, %v804
      %v806 = vrot.slane %v805, 1
      %v807 = vadd.f32 %v805, %v806
      %vm808 = vcmask 1040384
      %v809 = vsel %vm808, %v778, %v807
      %vm810 = vcmask 58368
      %811 = vst.msk [vmem:[%s317] sm:$0x3] %vm810, %v809
      %v812 = vld [vmem:[%s399] sm:$0xff]
      %v813 = vld [vmem:[%s399 + $0x20] sm:$0xff]
      %v814 = vld [vmem:[%s399 + $0x40] sm:$0xff]
      %v815 = vld [vmem:[%s399 + $0x60] sm:$0xff]
      %v816 = vld [vmem:[%s399 + $0x80] sm:$0xff]
      %v817 = vld [vmem:[%s399 + $0xa0] sm:$0xff]
      %v818 = vld [vmem:[%s399 + $0xc0] sm:$0xff]
      %v819 = vld [vmem:[%s399 + $0xe0] sm:$0xff]
      %v820 = vpack.c.bf16 %v813, %v812
      %v821 = vpack.c.bf16 %v815, %v814
      %v822 = vpack.c.bf16 %v817, %v816
      %v823 = vpack.c.bf16 %v819, %v818
      %v824 = vld [vmem:[%s2] sm:$0x3]
      %829 = vrot.lane.b32.xlu0 %v820, 124
      %v830 = vpop.permute.xlu0 %829
      %831 = vrot.lane.b32.xlu0 %v821, 124
      %v832 = vpop.permute.xlu0 %831
      %833 = vrot.lane.b32.xlu0 %v822, 124
      %v834 = vpop.permute.xlu0 %833
      %835 = vrot.lane.b32.xlu0 %v823, 124
      %v836 = vpop.permute.xlu0 %835
      %vm837 = vcmask 31744
      %v839 = vsel %vm837, %v830, 0
      %v842 = vsel %vm837, %v832, 0
      %v845 = vsel %vm837, %v834, 0
      %v848 = vsel %vm837, %v836, 0
      %v851 = vsel %vm717, %v824, 0
      %853 = vmatpush.bf16.msra.mxu0 0
      %854 = vmatpush.bf16.msra.mxu0 0
      %855 = vmatpush.bf16.msra.mxu0 0
      %856 = vmatpush.bf16.msra.mxu0 0
      %857 = vmatpush.bf16.msra.mxu0 0
      %858 = vmatpush.bf16.msra.mxu0 0
      %859 = vmatpush.bf16.msra.mxu0 0
      %860 = vmatpush.bf16.msra.mxu0 %v851
      %861 = vmatmul.bf16.gmra.mxu0 %v839
      %v862 = vpop.f32.mrf.mxu0
      %v863 = vadd.f32 0.0, %v862
      %v864 = vpop.f32.mrf.mxu0
      %v865 = vadd.f32 0.0, %v864
      %866 = vmatmul.bf16.gmra.mxu0 %v842
      %v867 = vpop.f32.mrf.mxu0
      %v868 = vadd.f32 0.0, %v867
      %v869 = vpop.f32.mrf.mxu0
      %v870 = vadd.f32 0.0, %v869
      %871 = vmatmul.bf16.gmra.mxu0 %v845
      %v872 = vpop.f32.mrf.mxu0
      %v873 = vadd.f32 0.0, %v872
      %v874 = vpop.f32.mrf.mxu0
      %v875 = vadd.f32 0.0, %v874
      %876 = vmatmul.bf16.gmra.mxu0 %v848
      %v877 = vpop.f32.mrf.mxu0
      %v878 = vadd.f32 0.0, %v877
      %v879 = vpop.f32.mrf.mxu0
      %v880 = vadd.f32 0.0, %v879
      %881 = vdwg.mxu0
      %882 = vst.msk [vmem:[%s326] sm:$0xff] %vm635, %v863
      %883 = vst.msk [vmem:[%s326 + $0x8] sm:$0xff] %vm635, %v865
      %884 = vst.msk [vmem:[%s326 + $0x10] sm:$0xff] %vm635, %v868
      %885 = vst.msk [vmem:[%s326 + $0x18] sm:$0xff] %vm635, %v870
      %886 = vst.msk [vmem:[%s326 + $0x20] sm:$0xff] %vm635, %v873
      %887 = vst.msk [vmem:[%s326 + $0x28] sm:$0xff] %vm635, %v875
      %888 = vst.msk [vmem:[%s326 + $0x30] sm:$0xff] %vm635, %v878
      %889 = vst.msk [vmem:[%s326 + $0x38] sm:$0xff] %vm635, %v880
      %v890 = vsel %vm635, %v863, 0.0
      %v891 = vsel %vm635, %v865, 0.0
      %v892 = vadd.f32 %v890, %v891
      %v893 = vsel %vm635, %v868, 0.0
      %v894 = vadd.f32 %v892, %v893
      %v895 = vsel %vm635, %v870, 0.0
      %v896 = vadd.f32 %v894, %v895
      %v897 = vsel %vm635, %v873, 0.0
      %v898 = vadd.f32 %v896, %v897
      %v899 = vsel %vm635, %v875, 0.0
      %v900 = vadd.f32 %v898, %v899
      %v901 = vsel %vm635, %v878, 0.0
      %v902 = vadd.f32 %v900, %v901
      %v903 = vsel %vm635, %v880, 0.0
      %v904 = vadd.f32 %v902, %v903
      %v905 = vrot.slane %v904, 4
      %v906 = vadd.f32 %v904, %v905
      %v907 = vrot.slane %v906, 2
      %v908 = vadd.f32 %v906, %v907
      %v909 = vrot.slane %v908, 1
      %v910 = vadd.f32 %v908, %v909
      %v911 = vmul.f32 %v863, %v863
      %v912 = vmul.f32 %v865, %v865
      %v913 = vmul.f32 %v868, %v868
      %v914 = vmul.f32 %v870, %v870
      %v915 = vmul.f32 %v873, %v873
      %v916 = vmul.f32 %v875, %v875
      %v917 = vmul.f32 %v878, %v878
      %v918 = vmul.f32 %v880, %v880
      %v919 = vsel %vm635, %v911, 0.0
      %v920 = vsel %vm635, %v912, 0.0
      %v921 = vadd.f32 %v919, %v920
      %v922 = vsel %vm635, %v913, 0.0
      %v923 = vadd.f32 %v921, %v922
      %v924 = vsel %vm635, %v914, 0.0
      %v925 = vadd.f32 %v923, %v924
      %v926 = vsel %vm635, %v915, 0.0
      %v927 = vadd.f32 %v925, %v926
      %v928 = vsel %vm635, %v916, 0.0
      %v929 = vadd.f32 %v927, %v928
      %v930 = vsel %vm635, %v917, 0.0
      %v931 = vadd.f32 %v929, %v930
      %v932 = vsel %vm635, %v918, 0.0
      %v933 = vadd.f32 %v931, %v932
      %v934 = vrot.slane %v933, 4
      %v935 = vadd.f32 %v933, %v934
      %v936 = vrot.slane %v935, 2
      %v937 = vadd.f32 %v935, %v936
      %v938 = vrot.slane %v937, 1
      %v939 = vadd.f32 %v937, %v938
      %v940 = vsel %vm808, %v910, %v939
      %941 = vst.msk [vmem:[%s334] sm:$0x3] %vm810, %v940
      %s942 = smul.u32 8, %s23
      %p943 = scmp.lt.s32.totalorder %s22, 1
      %s944 = scalar_select %p943, %s22, 1
      %p945 = scmp.lt.s32.totalorder %s942, 7
      %s946 = scalar_select %p945, %s942, 7
      %s947 = smul.addr %s944, 8
      %s948 = sadd.s32 %s946, %s947
      %s949 = smul.addr %s948, 8
      %s950 = scalar_lea.vmem %s3, %s949
      %p951 = scmp.lt.s32.totalorder %s22, 1
      %s952 = scalar_select %p951, %s22, 1
      %p953 = scmp.lt.s32.totalorder %s23, 0
      %s954 = scalar_select %p953, %s23, 0
      %s955 = sadd.s32 %s954, %s952
      %s956 = smul.addr %s955, 2
      %s957 = scalar_lea.vmem %s4, %s956
      %s958 = smul.u32 8, %s23
      %p959 = scmp.lt.s32.totalorder %s22, 1
      %s960 = scalar_select %p959, %s22, 1
      %p961 = scmp.lt.s32.totalorder %s958, 7
      %s962 = scalar_select %p961, %s958, 7
      %s963 = smul.addr %s960, 8
      %s964 = sadd.s32 %s962, %s963
      %s965 = smul.addr %s964, 8
      %s966 = scalar_lea.vmem %s5, %s965
      %p967 = scmp.lt.s32.totalorder %s22, 1
      %s968 = scalar_select %p967, %s22, 1
      %p969 = scmp.lt.s32.totalorder %s23, 0
      %s970 = scalar_select %p969, %s23, 0
      %s971 = sadd.s32 %s970, %s968
      %s972 = smul.addr %s971, 2
      %s973 = scalar_lea.vmem %s6, %s972
      // Predicated region
      $region33: #{basic_block_forward.3} parent=31 // pred_check
        %p974 = pneg %p118
      $region34: #{basic_block_forward.3} parent=31 // pred_check_branch
        %976 = sbr.rel (%p974) target = $region36
      $region35: #{basic_block_forward.3} parent=31 // pred_region
        %s977 = smul.u32 8, %s23
      $region36: #{basic_block_forward.3} parent=31 // pred_fallthru
        _
      // Predicated region
      $region37: #{basic_block_forward.3} parent=31 // pred_check
        %p978 = pneg %p146
      $region38: #{basic_block_forward.3} parent=31 // pred_check_branch
        %980 = sbr.rel (%p978) target = $region40
      $region39: #{basic_block_forward.3} parent=31 // pred_region
        _
      $region40: #{basic_block_forward.3} parent=31 // pred_fallthru
        _
      // Predicated region
      $region41: #{basic_block_forward.3} parent=31 // pred_check
        %p981 = pneg %p174
      $region42: #{basic_block_forward.3} parent=31 // pred_check_branch
        %983 = sbr.rel (%p981) target = $region44
      $region43: #{basic_block_forward.3} parent=31 // pred_region
        %s984 = smul.u32 8, %s23
      $region44: #{basic_block_forward.3} parent=31 // pred_fallthru
        _
      // Predicated region
      $region45: #{basic_block_forward.3} parent=31 // pred_check
        %p985 = pneg %p202
      $region46: #{basic_block_forward.3} parent=31 // pred_check_branch
        %987 = sbr.rel (%p985) target = $region48
      $region47: #{basic_block_forward.3} parent=31 // pred_region
        _
      $region48: #{basic_block_forward.3} parent=31 // pred_fallthru
        _
    $region32: #{basic_block_forward.3} parent=5 // pred_fallthru
      _
    %p988 = scmp.le.s32.totalorder 2, %s13
    // Predicated region
    $region49: #{basic_block_forward.3} parent=5 // pred_check
      %p989 = pneg %p988
    $region50: #{basic_block_forward.3} parent=5 // pred_check_branch
      %991 = sbr.rel (%p989) target = $region52
    $region51: #{basic_block_forward.3} parent=5 // pred_region
      %s992 = ssub.s32 %s13, 2
      // Predicated region
      $region53: #{basic_block_forward.3} parent=51 // pred_check
        %p993 = pneg %p124
      $region54: #{basic_block_forward.3} parent=51 // pred_check_branch
        %995 = sbr.rel (%p993) target = $region56
      $region55: #{basic_block_forward.3} parent=51 // pred_region
        %s996 = smul.u32 8, %s25
        %p997 = scmp.lt.s32.totalorder %s24, 1
        %s998 = scalar_select %p997, %s24, 1
        %p999 = scmp.lt.s32.totalorder %s996, 7
        %s1000 = scalar_select %p999, %s996, 7
        %s1001 = smul.addr %s998, 8
        %s1002 = sadd.s32 %s1000, %s1001
        %s1003 = smul.addr %s1002, 8
        %s1004 = scalar_lea.vmem %s3, %s1003
      $region56: #{basic_block_forward.3} parent=51 // pred_fallthru
        _
      // Predicated region
      $region57: #{basic_block_forward.3} parent=51 // pred_check
        %p1005 = pneg %p152
      $region58: #{basic_block_forward.3} parent=51 // pred_check_branch
        %1007 = sbr.rel (%p1005) target = $region60
      $region59: #{basic_block_forward.3} parent=51 // pred_region
        %p1008 = scmp.lt.s32.totalorder %s24, 1
        %s1009 = scalar_select %p1008, %s24, 1
        %p1010 = scmp.lt.s32.totalorder %s25, 0
        %s1011 = scalar_select %p1010, %s25, 0
        %s1012 = sadd.s32 %s1011, %s1009
        %s1013 = smul.addr %s1012, 2
        %s1014 = scalar_lea.vmem %s4, %s1013
      $region60: #{basic_block_forward.3} parent=51 // pred_fallthru
        _
      // Predicated region
      $region61: #{basic_block_forward.3} parent=51 // pred_check
        %p1015 = pneg %p180
      $region62: #{basic_block_forward.3} parent=51 // pred_check_branch
        %1017 = sbr.rel (%p1015) target = $region64
      $region63: #{basic_block_forward.3} parent=51 // pred_region
        %s1018 = smul.u32 8, %s25
        %p1019 = scmp.lt.s32.totalorder %s24, 1
        %s1020 = scalar_select %p1019, %s24, 1
        %p1021 = scmp.lt.s32.totalorder %s1018, 7
        %s1022 = scalar_select %p1021, %s1018, 7
        %s1023 = smul.addr %s1020, 8
        %s1024 = sadd.s32 %s1022, %s1023
        %s1025 = smul.addr %s1024, 8
        %s1026 = scalar_lea.vmem %s5, %s1025
      $region64: #{basic_block_forward.3} parent=51 // pred_fallthru
        _
      // Predicated region
      $region65: #{basic_block_forward.3} parent=51 // pred_check
        %p1027 = pneg %p208
      $region66: #{basic_block_forward.3} parent=51 // pred_check_branch
        %1029 = sbr.rel (%p1027) target = $region68
      $region67: #{basic_block_forward.3} parent=51 // pred_region
        %p1030 = scmp.lt.s32.totalorder %s24, 1
        %s1031 = scalar_select %p1030, %s24, 1
        %p1032 = scmp.lt.s32.totalorder %s25, 0
        %s1033 = scalar_select %p1032, %s25, 0
        %s1034 = sadd.s32 %s1033, %s1031
        %s1035 = smul.addr %s1034, 2
        %s1036 = scalar_lea.vmem %s6, %s1035
      $region68: #{basic_block_forward.3} parent=51 // pred_fallthru
        _
    $region52: #{basic_block_forward.3} parent=5 // pred_fallthru
      _
  $region6: #{basic_block_forward.3} parent=0 // loop_footer
    %s17 = sadd.s32 1, %s13
  $region7: #{basic_block_forward.3} parent=0 // loop_footer_branch
    %12 = sbr.rel target = $region3
  $region8: #{basic_block_forward.3} parent=0 // loop_exit
    _

</llo_original>
